<compile_context>
chip_gen: v6e
topology: v6e:2x2x1
jax: 0.10.0
libtpu: 0.0.40
codegen_flags: <defaults>
</compile_context>

<pallas_src>
import functools

import jax
import jax.numpy as jnp
from jax.experimental import pallas as pl
from jax.experimental.pallas import tpu as pltpu


RBF_BANDWIDTHS = (10.0, 15.0, 20.0, 50.0)
MULTISCALE_BANDWIDTHS = (0.2, 0.5, 0.9, 1.3)

# dot_general dimension numbers for "A @ B.T": contract the feature dim of BOTH
# operands, so no in-kernel transpose is ever needed.
_CONTRACT_FEATURES = (((1,), (1,)), ((), ()))


# ----------------------------- Pallas kernel -------------------------------

def _mmd_kernel(z_ref, o_ref, *, n, tm, kernel_type):
    """One row-tile of the MMD loss.

    z_ref : (2n, dpad) VMEM block = [x; y] with the feature dim zero-padded to a
            multiple of 128.  Constant index_map -> DMA'd once, resident for all
            grid steps.
    o_ref : (1, 1, 1) per-tile partial  sum(XX_rows) + sum(YY_rows) - 2*sum(XY_rows).
    """
    dpad = z_ref.shape[1]

    # Rows of this tile: the t-th row tile of x stacked on the t-th row tile of y.
    if tm == n:                      # single-tile fast path (test shapes): tile == z
        zt = z_ref[...]
    else:
        i0 = pl.multiple_of(pl.program_id(0) * tm, tm)
        zt = jnp.concatenate(
            [z_ref[pl.ds(i0, tm), :], z_ref[pl.ds(n + i0, tm), :]], axis=0)

    # --- Fused Gram: ONE MXU call covers the xx / yy / xy blocks.
    #     g[:tm,:n] = x_t @ x.T, g[tm:,n:] = y_t @ y.T, g[:tm,n:] = x_t @ y.T
    g = jax.lax.dot_general(zt, z_ref[...], _CONTRACT_FEATURES,
                            preferred_element_type=jnp.float32)        # (2tm, 2n) f32

    # --- Squared norms (replaces the old iota-mask diagonal extraction).
    ztf = zt.astype(jnp.float32)
    r_tile = jnp.sum(ztf * ztf, axis=1, keepdims=True)                 # (2tm, 1)
    zf = z_ref[...].astype(jnp.float32)
    # Row-vector form of the per-sample norms WITHOUT an in-kernel transpose:
    # ones(8,d) @ (z*z).T -> every row equals the norm vector; keep row 0.
    ones8 = jnp.ones((8, dpad), jnp.float32)
    r_full = jax.lax.dot_general(ones8, zf * zf, _CONTRACT_FEATURES,
                                 preferred_element_type=jnp.float32)[0:1, :]  # (1, 2n)

    rx_t, ry_t = r_tile[:tm, :], r_tile[tm:, :]                        # (tm, 1)
    rx_f, ry_f = r_full[:, :n], r_full[:, n:]                          # (1, n)

    # --- Epilogue: one distance block at a time; 4-bandwidth sum; reduce to (1,1).
    def term(g_blk, r_rows, r_cols):
        # pairwise squared distances; clamp few-ulp negatives (diagonal) to 0.
        dist = jnp.maximum(r_rows + r_cols - 2.0 * g_blk, 0.0)
        acc = jnp.zeros_like(dist)
        if kernel_type == "rbf":
            for a in RBF_BANDWIDTHS:
                acc = acc + jnp.exp(dist * (-0.5 / a))
        elif kernel_type == "multiscale":
            # TODO(synk): a2 * pl.reciprocal(a2 + dist, approx=True) would free VALU
            # slots, but its per-element error is too loose for the reference check.
            for a in MULTISCALE_BANDWIDTHS:
                a2 = a * a
                acc = acc + a2 / (a2 + dist)
        else:  # trace-time (static) check
            raise ValueError(f"unsupported kernel: {kernel_type}")
        s = jnp.sum(acc, axis=1, keepdims=True)     # lane reduce    -> (tm, 1)
        return jnp.sum(s, axis=0, keepdims=True)    # sublane reduce -> (1, 1)

    part = (term(g[:tm, :n], rx_t, rx_f)            # XX rows
            + term(g[tm:, n:], ry_t, ry_f)          # YY rows
            - 2.0 * term(g[:tm, n:], rx_t, ry_f))   # XY rows (g[tm:, :n] == ZZ^T is
                                                    # never touched by the epilogue)
    o_ref[0] = part


# ----------------------------- wrapper --------------------------------------

def _pick_row_tile(n):
    """Largest row tile dividing n that keeps the (2*tm, 2*n) f32 Gram block (and
    the (tm, n) epilogue temporaries) comfortably inside VMEM on v5e/v6e/v7x."""
    cap = max(8, (8 * 1024 * 1024) // (16 * n))     # 2*tm * 2*n * 4B <= 8 MiB
    if n <= cap:
        return n
    for cand in (1024, 512, 256, 128, 64, 32, 16, 8):
        if cand <= cap and n % cand == 0:
            return cand
    # TODO(synk): ragged n with no aligned divisor falls back to un-tiled; a 2-D
    # (row, col) tiling with masking would be needed for huge non-aligned n.
    return n


def mmd_loss(x, y, kernel="rbf"):
    """MMD loss between feature matrices x, y of identical shape (n, d)."""
    assert x.ndim == 2 and x.shape == y.shape, (x.shape, y.shape)
    n, d = x.shape

    # Stack once in the wrapper and zero-pad the feature dim to a lane-dense,
    # MXU-K-aligned multiple of 128 (zero columns change neither Gram nor norms).
    # Caller dtype passes straight through (bf16 stays bf16 for the MXU); Gram
    # accumulation and the whole epilogue run in f32 inside the kernel.
    dpad = max(128, ((d + 127) // 128) * 128)
    z = jnp.concatenate([x, y], axis=0)
    if dpad != d:
        z = jnp.pad(z, ((0, 0), (0, dpad - d)))

    tm = _pick_row_tile(n)
    num_tiles = n // tm

    partials = pl.pallas_call(
        functools.partial(_mmd_kernel, n=n, tm=tm, kernel_type=kernel),
        out_shape=jax.ShapeDtypeStruct((num_tiles, 1, 1), jnp.float32),
        grid=(num_tiles,),
        in_specs=[pl.BlockSpec((2 * n, dpad), lambda t: (0, 0))],  # resident, 1 DMA
        out_specs=pl.BlockSpec((1, 1, 1), lambda t: (t, 0, 0)),    # per-tile partial
        compiler_params=pltpu.CompilerParams(
            dimension_semantics=("parallel",)),   # independent tiles -> both v7x TCs
    )(z)
    return jnp.sum(partials) / float(n * n)


# ----------------------------- pure-JAX reference ---------------------------

def mmd_loss_ref(x, y, kernel="rbf"):
    xx, yy, zz = x @ x.T, y @ y.T, x @ y.T
    rx = jnp.broadcast_to(jnp.diag(xx)[None, :], xx.shape)
    ry = jnp.broadcast_to(jnp.diag(yy)[None, :], yy.shape)
    dxx = rx.T + rx - 2.0 * xx
    dyy = ry.T + ry - 2.0 * yy
    dxy = rx.T + ry - 2.0 * zz
    XX = jnp.zeros_like(xx)
    YY = jnp.zeros_like(xx)
    XY = jnp.zeros_like(xx)
    if kernel == "multiscale":
        for a in MULTISCALE_BANDWIDTHS:
            XX += a ** 2 * (a ** 2 + dxx) ** (-1)
            YY += a ** 2 * (a ** 2 + dyy) ** (-1)
            XY += a ** 2 * (a ** 2 + dxy) ** (-1)
    if kernel == "rbf":
        for a in RBF_BANDWIDTHS:
            XX += jnp.exp(-0.5 * dxx / a)
            YY += jnp.exp(-0.5 * dyy / a)
            XY += jnp.exp(-0.5 * dxy / a)
    return jnp.mean(XX + YY - 2.0 * XY)


# ----------------------------- main ------------------------------------------

if __name__ == "__main__":
    key = jax.random.PRNGKey(0)
    kx, ky = jax.random.split(key)

    n, d = 128, 64  # small feature matrices: n samples, d-dim features
    x = jax.random.normal(kx, (n, d), jnp.float32)
    y = 0.5 * jax.random.normal(ky, (n, d), jnp.float32) + 0.25

    for kern in ("rbf", "multiscale"):
        got = jax.block_until_ready(mmd_loss(x, y, kernel=kern))
        want = jax.block_until_ready(mmd_loss_ref(x, y, kernel=kern))
        assert bool(jnp.isfinite(got)), (kern, got)
        # Tolerance: rbf agrees to ~1e-6; the multiscale a=0.2 term amplifies the
        # few-ulp difference between diag-from-norms (perf opt) and the reference's
        # exact-zero diagonal, so allow up to ~1e-3 relative on the scalar loss.
        assert bool(jnp.allclose(got, want, rtol=1e-3, atol=1e-5)), (kern, got, want)

    print("KERNEL_OK")
</pallas_src>

<mosaic_0001>
module attributes {stable_mosaic.version = 11 : i64} {
  func.func @_mmd_kernel(%arg0: i32, %arg1: memref<256x128xf32, #tpu.memory_space<vmem>>, %arg2: memref<1x1x1xf32, #tpu.memory_space<vmem>>) attributes {dimension_semantics = [#tpu.dimension_semantics<parallel>], iteration_bounds = array<i64: 1>, scalar_prefetch = 0 : i64, scratch_operands = 0 : i64, tpu.core_type = #tpu.core_type<tc>, window_params = [{pipeline_mode = #tpu.pipeline_mode<synchronous>, transform_indices = @transform_0, window_bounds = array<i64: 256, 128>}, {transform_indices = @transform_1, window_bounds = array<i64: 1, 1, 1>}]} {
    %c0 = arith.constant 0 : index
    %c0_0 = arith.constant 0 : index
    %0 = vector.load %arg1[%c0, %c0_0] : memref<256x128xf32, #tpu.memory_space<vmem>>, vector<256x128xf32>
    %c0_1 = arith.constant 0 : index
    %c0_2 = arith.constant 0 : index
    %1 = vector.load %arg1[%c0_1, %c0_2] : memref<256x128xf32, #tpu.memory_space<vmem>>, vector<256x128xf32>
    %cst = arith.constant dense<0.000000e+00> : vector<256x256xf32>
    %2 = tpu.matmul %0, %1, %cst {dimension_numbers = #tpu.dot_dimension_numbers<[1], [1], [0], [0], [0, 0, 1, 0], [], []>} : vector<256x128xf32>, vector<256x128xf32>, vector<256x256xf32> -> vector<256x256xf32>
    %3 = arith.mulf %0, %0 : vector<256x128xf32>
    %cst_3 = arith.constant dense<0.000000e+00> : vector<256xf32>
    %4 = vector.multi_reduction <add>, %3, %cst_3 [1] : vector<256x128xf32> to vector<256xf32>
    %5 = vector.shape_cast %4 : vector<256xf32> to vector<256x1xf32>
    %c0_4 = arith.constant 0 : index
    %c0_5 = arith.constant 0 : index
    %6 = vector.load %arg1[%c0_4, %c0_5] : memref<256x128xf32, #tpu.memory_space<vmem>>, vector<256x128xf32>
    %cst_6 = arith.constant 1.000000e+00 : f32
    %7 = vector.broadcast %cst_6 : f32 to vector<8x128xf32>
    %8 = arith.mulf %6, %6 : vector<256x128xf32>
    %cst_7 = arith.constant dense<0.000000e+00> : vector<8x256xf32>
    %9 = tpu.matmul %7, %8, %cst_7 {dimension_numbers = #tpu.dot_dimension_numbers<[1], [1], [0], [0], [0, 0, 1, 0], [], []>} : vector<8x128xf32>, vector<256x128xf32>, vector<8x256xf32> -> vector<8x256xf32>
    %10 = vector.extract_strided_slice %9 {offsets = [0, 0], sizes = [1, 256], strides = [1, 1]} : vector<8x256xf32> to vector<1x256xf32>
    %11 = vector.extract_strided_slice %5 {offsets = [0, 0], sizes = [128, 1], strides = [1, 1]} : vector<256x1xf32> to vector<128x1xf32>
    %12 = vector.extract_strided_slice %5 {offsets = [128, 0], sizes = [128, 1], strides = [1, 1]} : vector<256x1xf32> to vector<128x1xf32>
    %13 = vector.extract_strided_slice %10 {offsets = [0, 0], sizes = [1, 128], strides = [1, 1]} : vector<1x256xf32> to vector<1x128xf32>
    %14 = vector.extract_strided_slice %10 {offsets = [0, 128], sizes = [1, 128], strides = [1, 1]} : vector<1x256xf32> to vector<1x128xf32>
    %15 = vector.extract_strided_slice %2 {offsets = [0, 0], sizes = [128, 128], strides = [1, 1]} : vector<256x256xf32> to vector<128x128xf32>
    %16 = vector.broadcast %11 : vector<128x1xf32> to vector<128x128xf32>
    %17 = vector.broadcast %13 : vector<1x128xf32> to vector<128x128xf32>
    %18 = arith.addf %16, %17 : vector<128x128xf32>
    %cst_8 = arith.constant 2.000000e+00 : f32
    %19 = vector.broadcast %cst_8 : f32 to vector<128x128xf32>
    %20 = arith.mulf %19, %15 : vector<128x128xf32>
    %21 = arith.subf %18, %20 : vector<128x128xf32>
    %cst_9 = arith.constant 0.000000e+00 : f32
    %22 = vector.broadcast %cst_9 : f32 to vector<128x128xf32>
    %23 = arith.maximumf %21, %22 : vector<128x128xf32>
    %cst_10 = arith.constant 0.000000e+00 : f32
    %24 = vector.broadcast %cst_10 : f32 to vector<128x128xf32>
    %cst_11 = arith.constant -5.000000e-02 : f32
    %25 = vector.broadcast %cst_11 : f32 to vector<128x128xf32>
    %26 = arith.mulf %23, %25 : vector<128x128xf32>
    %27 = math.exp %26 : vector<128x128xf32>
    %28 = arith.addf %24, %27 : vector<128x128xf32>
    %cst_12 = arith.constant -0.0333333351 : f32
    %29 = vector.broadcast %cst_12 : f32 to vector<128x128xf32>
    %30 = arith.mulf %23, %29 : vector<128x128xf32>
    %31 = math.exp %30 : vector<128x128xf32>
    %32 = arith.addf %28, %31 : vector<128x128xf32>
    %cst_13 = arith.constant -2.500000e-02 : f32
    %33 = vector.broadcast %cst_13 : f32 to vector<128x128xf32>
    %34 = arith.mulf %23, %33 : vector<128x128xf32>
    %35 = math.exp %34 : vector<128x128xf32>
    %36 = arith.addf %32, %35 : vector<128x128xf32>
    %cst_14 = arith.constant -0.00999999977 : f32
    %37 = vector.broadcast %cst_14 : f32 to vector<128x128xf32>
    %38 = arith.mulf %23, %37 : vector<128x128xf32>
    %39 = math.exp %38 : vector<128x128xf32>
    %40 = arith.addf %36, %39 : vector<128x128xf32>
    %cst_15 = arith.constant dense<0.000000e+00> : vector<128xf32>
    %41 = vector.multi_reduction <add>, %40, %cst_15 [1] : vector<128x128xf32> to vector<128xf32>
    %42 = vector.shape_cast %41 : vector<128xf32> to vector<128x1xf32>
    %cst_16 = arith.constant dense<0.000000e+00> : vector<1xf32>
    %43 = vector.multi_reduction <add>, %42, %cst_16 [0] : vector<128x1xf32> to vector<1xf32>
    %44 = vector.shape_cast %43 : vector<1xf32> to vector<1x1xf32>
    %45 = vector.extract_strided_slice %2 {offsets = [128, 128], sizes = [128, 128], strides = [1, 1]} : vector<256x256xf32> to vector<128x128xf32>
    %46 = vector.broadcast %12 : vector<128x1xf32> to vector<128x128xf32>
    %47 = vector.broadcast %14 : vector<1x128xf32> to vector<128x128xf32>
    %48 = arith.addf %46, %47 : vector<128x128xf32>
    %cst_17 = arith.constant 2.000000e+00 : f32
    %49 = vector.broadcast %cst_17 : f32 to vector<128x128xf32>
    %50 = arith.mulf %49, %45 : vector<128x128xf32>
    %51 = arith.subf %48, %50 : vector<128x128xf32>
    %cst_18 = arith.constant 0.000000e+00 : f32
    %52 = vector.broadcast %cst_18 : f32 to vector<128x128xf32>
    %53 = arith.maximumf %51, %52 : vector<128x128xf32>
    %cst_19 = arith.constant 0.000000e+00 : f32
    %54 = vector.broadcast %cst_19 : f32 to vector<128x128xf32>
    %cst_20 = arith.constant -5.000000e-02 : f32
    %55 = vector.broadcast %cst_20 : f32 to vector<128x128xf32>
    %56 = arith.mulf %53, %55 : vector<128x128xf32>
    %57 = math.exp %56 : vector<128x128xf32>
    %58 = arith.addf %54, %57 : vector<128x128xf32>
    %cst_21 = arith.constant -0.0333333351 : f32
    %59 = vector.broadcast %cst_21 : f32 to vector<128x128xf32>
    %60 = arith.mulf %53, %59 : vector<128x128xf32>
    %61 = math.exp %60 : vector<128x128xf32>
    %62 = arith.addf %58, %61 : vector<128x128xf32>
    %cst_22 = arith.constant -2.500000e-02 : f32
    %63 = vector.broadcast %cst_22 : f32 to vector<128x128xf32>
    %64 = arith.mulf %53, %63 : vector<128x128xf32>
    %65 = math.exp %64 : vector<128x128xf32>
    %66 = arith.addf %62, %65 : vector<128x128xf32>
    %cst_23 = arith.constant -0.00999999977 : f32
    %67 = vector.broadcast %cst_23 : f32 to vector<128x128xf32>
    %68 = arith.mulf %53, %67 : vector<128x128xf32>
    %69 = math.exp %68 : vector<128x128xf32>
    %70 = arith.addf %66, %69 : vector<128x128xf32>
    %cst_24 = arith.constant dense<0.000000e+00> : vector<128xf32>
    %71 = vector.multi_reduction <add>, %70, %cst_24 [1] : vector<128x128xf32> to vector<128xf32>
    %72 = vector.shape_cast %71 : vector<128xf32> to vector<128x1xf32>
    %cst_25 = arith.constant dense<0.000000e+00> : vector<1xf32>
    %73 = vector.multi_reduction <add>, %72, %cst_25 [0] : vector<128x1xf32> to vector<1xf32>
    %74 = vector.shape_cast %73 : vector<1xf32> to vector<1x1xf32>
    %75 = arith.addf %44, %74 : vector<1x1xf32>
    %76 = vector.extract_strided_slice %2 {offsets = [0, 128], sizes = [128, 128], strides = [1, 1]} : vector<256x256xf32> to vector<128x128xf32>
    %77 = vector.broadcast %11 : vector<128x1xf32> to vector<128x128xf32>
    %78 = vector.broadcast %14 : vector<1x128xf32> to vector<128x128xf32>
    %79 = arith.addf %77, %78 : vector<128x128xf32>
    %cst_26 = arith.constant 2.000000e+00 : f32
    %80 = vector.broadcast %cst_26 : f32 to vector<128x128xf32>
    %81 = arith.mulf %80, %76 : vector<128x128xf32>
    %82 = arith.subf %79, %81 : vector<128x128xf32>
    %cst_27 = arith.constant 0.000000e+00 : f32
    %83 = vector.broadcast %cst_27 : f32 to vector<128x128xf32>
    %84 = arith.maximumf %82, %83 : vector<128x128xf32>
    %cst_28 = arith.constant 0.000000e+00 : f32
    %85 = vector.broadcast %cst_28 : f32 to vector<128x128xf32>
    %cst_29 = arith.constant -5.000000e-02 : f32
    %86 = vector.broadcast %cst_29 : f32 to vector<128x128xf32>
    %87 = arith.mulf %84, %86 : vector<128x128xf32>
    %88 = math.exp %87 : vector<128x128xf32>
    %89 = arith.addf %85, %88 : vector<128x128xf32>
    %cst_30 = arith.constant -0.0333333351 : f32
    %90 = vector.broadcast %cst_30 : f32 to vector<128x128xf32>
    %91 = arith.mulf %84, %90 : vector<128x128xf32>
    %92 = math.exp %91 : vector<128x128xf32>
    %93 = arith.addf %89, %92 : vector<128x128xf32>
    %cst_31 = arith.constant -2.500000e-02 : f32
    %94 = vector.broadcast %cst_31 : f32 to vector<128x128xf32>
    %95 = arith.mulf %84, %94 : vector<128x128xf32>
    %96 = math.exp %95 : vector<128x128xf32>
    %97 = arith.addf %93, %96 : vector<128x128xf32>
    %cst_32 = arith.constant -0.00999999977 : f32
    %98 = vector.broadcast %cst_32 : f32 to vector<128x128xf32>
    %99 = arith.mulf %84, %98 : vector<128x128xf32>
    %100 = math.exp %99 : vector<128x128xf32>
    %101 = arith.addf %97, %100 : vector<128x128xf32>
    %cst_33 = arith.constant dense<0.000000e+00> : vector<128xf32>
    %102 = vector.multi_reduction <add>, %101, %cst_33 [1] : vector<128x128xf32> to vector<128xf32>
    %103 = vector.shape_cast %102 : vector<128xf32> to vector<128x1xf32>
    %cst_34 = arith.constant dense<0.000000e+00> : vector<1xf32>
    %104 = vector.multi_reduction <add>, %103, %cst_34 [0] : vector<128x1xf32> to vector<1xf32>
    %105 = vector.shape_cast %104 : vector<1xf32> to vector<1x1xf32>
    %cst_35 = arith.constant 2.000000e+00 : f32
    %106 = vector.broadcast %cst_35 : f32 to vector<1x1xf32>
    %107 = arith.mulf %106, %105 : vector<1x1xf32>
    %108 = arith.subf %75, %107 : vector<1x1xf32>
    %c0_36 = arith.constant 0 : index
    %c0_37 = arith.constant 0 : index
    %c0_38 = arith.constant 0 : index
    %109 = vector.load %arg2[%c0_36, %c0_37, %c0_38] : memref<1x1x1xf32, #tpu.memory_space<vmem>>, vector<1x1x1xf32>
    %110 = vector.shape_cast %109 : vector<1x1x1xf32> to vector<1x1xf32>
    %111 = vector.shape_cast %108 : vector<1x1xf32> to vector<1x1x1xf32>
    tpu.vector_store %arg2[%c0_36, %c0_37, %c0_38], %111 {strides = array<i32>} : memref<1x1x1xf32, #tpu.memory_space<vmem>>, vector<1x1x1xf32>,
    return
  }
  func.func @transform_0(%arg0: i32) -> (i32, i32) {
    %c0_i32 = arith.constant 0 : i32
    %c0_i32_0 = arith.constant 0 : i32
    %c0_i32_1 = arith.constant 0 : i32
    return %c0_i32, %c0_i32_0 : i32, i32
  }
  func.func @transform_1(%arg0: i32) -> (i32, i32, i32) {
    %c0_i32 = arith.constant 0 : i32
    %c0_i32_0 = arith.constant 0 : i32
    %c0_i32_1 = arith.constant 0 : i32
    return %arg0, %c0_i32, %c0_i32_0 : i32, i32, i32
  }
}

</mosaic_0001>

<llo_original>
// kernel: tpu_custom_call.1
$region0: #{tpu_custom_call.1}
  #allocation0 [shape = 'u32[]', space=smem, size = 0x4, offset = 0x4, fixed_abs, tag = 'smem constant byte address 0x4 - core index']
  #allocation1 [shape = 'u32[144,128]{1,0:T(1,128)}', space=vmem, size = 0x12000, scoped, tag = 'internal scratch']
  %s0 = inlined_call_operand.hbm [shape: f32[256,128], index: 0, kind: input, shape index: {}]
  %s1 = inlined_call_operand.hbm [shape: f32[1,1,1], index: 1, kind: output, shape index: {}]
  %s2 = sld [smem:[#allocation0]]
  $region18: #{tpu_custom_call.1} parent=0
    _
  %s4 = ssub.s32 1, %s2
  %s5 = scalar_select 0, %s4, %s2
  $region1: #{tpu_custom_call.1} parent=0
    #allocation2 [shape = 'u8[131072]{0}', space=vmem, size = 0x20000, scoped, tag = 'input window, operand 0, single buffered']
    #allocation3 [shape = 's32[1]{0}', space=sflag, size = 0x4, scoped, tag = 'scoped memory for tpu_custom_call.1']
    #allocation4 [shape = 's32[1]{0}', space=sflag, size = 0x4, scoped, tag = 'scoped memory for tpu_custom_call.1']
    #allocation5 [shape = 'u8[512]{0}', space=vmem, size = 0x400, scoped, tag = 'output window, operand 0, single buffered']
    %6 = vsyncpa [#allocation3], 0
    %7 = vsyncpa [#allocation4], 0
    // Predicated region
    $region2: #{tpu_custom_call.1} parent=1 // pred_check
      _
    $region3: #{tpu_custom_call.1} parent=1 // pred_check_branch
      %9 = sbr.rel (0) target = $region5
    $region4: #{tpu_custom_call.1} parent=1 // pred_region
      %s11 = ssub.s32 4096, 4096
      %12 = vsyncadd [#allocation3], %s11
      %s13 = sshll.u32 [#allocation2], 4
      %s14 = int_to_ptr.vmem [resolvable:$true] %s13
      %19 = dma.hbm_to_vmem [thread:$0]  %s0, 4096, %s14, [#allocation3], 128, 128, 8
    $region5: #{tpu_custom_call.1} parent=1 // pred_fallthru
      _
    // Predicated region
    $region6: #{tpu_custom_call.1} parent=1 // pred_check
      _
    $region7: #{tpu_custom_call.1} parent=1 // pred_check_branch
      %21 = sbr.rel (0) target = $region9
    $region8: #{tpu_custom_call.1} parent=1 // pred_region
      %22 = dma.done [#allocation3], 4096
    $region9: #{tpu_custom_call.1} parent=1 // pred_fallthru
      _
    %v23 = vld [vmem:[#allocation2] sm:$0xff]
    %v24 = vld [vmem:[#allocation2 + $0x8] sm:$0xff]
    %v25 = vld [vmem:[#allocation2 + $0x10] sm:$0xff]
    %v26 = vld [vmem:[#allocation2 + $0x18] sm:$0xff]
    %v27 = vld [vmem:[#allocation2 + $0x20] sm:$0xff]
    %v28 = vld [vmem:[#allocation2 + $0x28] sm:$0xff]
    %v29 = vld [vmem:[#allocation2 + $0x30] sm:$0xff]
    %v30 = vld [vmem:[#allocation2 + $0x38] sm:$0xff]
    %v31 = vld [vmem:[#allocation2 + $0x40] sm:$0xff]
    %v32 = vld [vmem:[#allocation2 + $0x48] sm:$0xff]
    %v33 = vld [vmem:[#allocation2 + $0x50] sm:$0xff]
    %v34 = vld [vmem:[#allocation2 + $0x58] sm:$0xff]
    %v35 = vld [vmem:[#allocation2 + $0x60] sm:$0xff]
    %v36 = vld [vmem:[#allocation2 + $0x68] sm:$0xff]
    %v37 = vld [vmem:[#allocation2 + $0x70] sm:$0xff]
    %v38 = vld [vmem:[#allocation2 + $0x78] sm:$0xff]
    %v39 = vld [vmem:[#allocation2 + $0x80] sm:$0xff]
    %v40 = vld [vmem:[#allocation2 + $0x88] sm:$0xff]
    %v41 = vld [vmem:[#allocation2 + $0x90] sm:$0xff]
    %v42 = vld [vmem:[#allocation2 + $0x98] sm:$0xff]
    %v43 = vld [vmem:[#allocation2 + $0xa0] sm:$0xff]
    %v44 = vld [vmem:[#allocation2 + $0xa8] sm:$0xff]
    %v45 = vld [vmem:[#allocation2 + $0xb0] sm:$0xff]
    %v46 = vld [vmem:[#allocation2 + $0xb8] sm:$0xff]
    %v47 = vld [vmem:[#allocation2 + $0xc0] sm:$0xff]
    %v48 = vld [vmem:[#allocation2 + $0xc8] sm:$0xff]
    %v49 = vld [vmem:[#allocation2 + $0xd0] sm:$0xff]
    %v50 = vld [vmem:[#allocation2 + $0xd8] sm:$0xff]
    %v51 = vld [vmem:[#allocation2 + $0xe0] sm:$0xff]
    %v52 = vld [vmem:[#allocation2 + $0xe8] sm:$0xff]
    %v53 = vld [vmem:[#allocation2 + $0xf0] sm:$0xff]
    %v54 = vld [vmem:[#allocation2 + $0xf8] sm:$0xff]
    %55 = vmatprep.subr.mxu0 0.0
    %56 = vmatpush1.xpose.msra.mxu0 %v38
    %57 = vmatprep.subr.mxu0 0.0
    %58 = vmatpush1.xpose.msra.mxu0 %v37
    %59 = vmatprep.subr.mxu0 0.0
    %60 = vmatpush1.xpose.msra.mxu0 %v36
    %61 = vmatprep.subr.mxu0 0.0
    %62 = vmatpush1.xpose.msra.mxu0 %v35
    %63 = vmatprep.subr.mxu0 0.0
    %64 = vmatpush1.xpose.msra.mxu0 %v34
    %65 = vmatprep.subr.mxu0 0.0
    %66 = vmatpush1.xpose.msra.mxu0 %v33
    %67 = vmatprep.subr.mxu0 0.0
    %68 = vmatpush1.xpose.msra.mxu0 %v32
    %69 = vmatprep.subr.mxu0 0.0
    %70 = vmatpush1.xpose.msra.mxu0 %v31
    %71 = vmatprep.subr.mxu0 0.0
    %72 = vmatpush1.xpose.msra.mxu0 %v30
    %73 = vmatprep.subr.mxu0 0.0
    %74 = vmatpush1.xpose.msra.mxu0 %v29
    %75 = vmatprep.subr.mxu0 0.0
    %76 = vmatpush1.xpose.msra.mxu0 %v28
    %77 = vmatprep.subr.mxu0 0.0
    %78 = vmatpush1.xpose.msra.mxu0 %v27
    %79 = vmatprep.subr.mxu0 0.0
    %80 = vmatpush1.xpose.msra.mxu0 %v26
    %81 = vmatprep.subr.mxu0 0.0
    %82 = vmatpush1.xpose.msra.mxu0 %v25
    %83 = vmatprep.subr.mxu0 0.0
    %84 = vmatpush1.xpose.msra.mxu0 %v24
    %85 = vmatprep.subr.mxu0 0.0
    %86 = vmatpush1.xpose.msra.mxu0 %v23
    %87 = vmatprep.subr.mxu0 0.0
    %88 = vmatpush2.xpose.msra.mxu0 %v54
    %89 = vmatprep.subr.mxu0 0.0
    %90 = vmatpush2.xpose.msra.mxu0 %v53
    %91 = vmatprep.subr.mxu0 0.0
    %92 = vmatpush2.xpose.msra.mxu0 %v52
    %93 = vmatprep.subr.mxu0 0.0
    %94 = vmatpush2.xpose.msra.mxu0 %v51
    %95 = vmatprep.subr.mxu0 0.0
    %96 = vmatpush2.xpose.msra.mxu0 %v50
    %97 = vmatprep.subr.mxu0 0.0
    %98 = vmatpush2.xpose.msra.mxu0 %v49
    %99 = vmatprep.subr.mxu0 0.0
    %100 = vmatpush2.xpose.msra.mxu0 %v48
    %101 = vmatprep.subr.mxu0 0.0
    %102 = vmatpush2.xpose.msra.mxu0 %v47
    %103 = vmatprep.subr.mxu0 0.0
    %104 = vmatpush2.xpose.msra.mxu0 %v46
    %105 = vmatprep.subr.mxu0 0.0
    %106 = vmatpush2.xpose.msra.mxu0 %v45
    %107 = vmatprep.subr.mxu0 0.0
    %108 = vmatpush2.xpose.msra.mxu0 %v44
    %109 = vmatprep.subr.mxu0 0.0
    %110 = vmatpush2.xpose.msra.mxu0 %v43
    %111 = vmatprep.subr.mxu0 0.0
    %112 = vmatpush2.xpose.msra.mxu0 %v42
    %113 = vmatprep.subr.mxu0 0.0
    %114 = vmatpush2.xpose.msra.mxu0 %v41
    %115 = vmatprep.subr.mxu0 0.0
    %116 = vmatpush2.xpose.msra.mxu0 %v40
    %117 = vmatprep.subr.mxu0 0.0
    %118 = vmatpush2.xpose.msra.mxu0 %v39
    %119 = vmatprep.mubr.f32.mxu0 0.0
    %120 = vmatmul.mubr.f32.gmra.mxu0 %v23
    %v121 = vpop.f32.mrf.mxu0
    %v122 = vadd.f32 0.0, %v121
    %v123 = vpop.f32.mrf.mxu0
    %v124 = vadd.f32 0.0, %v123
    %125 = vmatprep.mubr.f32.mxu0 0.0
    %126 = vmatmul.mubr.f32.gmra.mxu0 %v24
    %v127 = vpop.f32.mrf.mxu0
    %v128 = vadd.f32 0.0, %v127
    %v129 = vpop.f32.mrf.mxu0
    %v130 = vadd.f32 0.0, %v129
    %131 = vmatprep.mubr.f32.mxu0 0.0
    %132 = vmatmul.mubr.f32.gmra.mxu0 %v25
    %v133 = vpop.f32.mrf.mxu0
    %v134 = vadd.f32 0.0, %v133
    %v135 = vpop.f32.mrf.mxu0
    %v136 = vadd.f32 0.0, %v135
    %137 = vmatprep.mubr.f32.mxu0 0.0
    %138 = vmatmul.mubr.f32.gmra.mxu0 %v26
    %v139 = vpop.f32.mrf.mxu0
    %v140 = vadd.f32 0.0, %v139
    %v141 = vpop.f32.mrf.mxu0
    %v142 = vadd.f32 0.0, %v141
    %143 = vmatprep.mubr.f32.mxu0 0.0
    %144 = vmatmul.mubr.f32.gmra.mxu0 %v27
    %v145 = vpop.f32.mrf.mxu0
    %v146 = vadd.f32 0.0, %v145
    %v147 = vpop.f32.mrf.mxu0
    %v148 = vadd.f32 0.0, %v147
    %149 = vmatprep.mubr.f32.mxu0 0.0
    %150 = vmatmul.mubr.f32.gmra.mxu0 %v28
    %v151 = vpop.f32.mrf.mxu0
    %v152 = vadd.f32 0.0, %v151
    %v153 = vpop.f32.mrf.mxu0
    %v154 = vadd.f32 0.0, %v153
    %155 = vmatprep.mubr.f32.mxu0 0.0
    %156 = vmatmul.mubr.f32.gmra.mxu0 %v29
    %v157 = vpop.f32.mrf.mxu0
    %v158 = vadd.f32 0.0, %v157
    %v159 = vpop.f32.mrf.mxu0
    %v160 = vadd.f32 0.0, %v159
    %161 = vmatprep.mubr.f32.mxu0 0.0
    %162 = vmatmul.mubr.f32.gmra.mxu0 %v30
    %v163 = vpop.f32.mrf.mxu0
    %v164 = vadd.f32 0.0, %v163
    %v165 = vpop.f32.mrf.mxu0
    %v166 = vadd.f32 0.0, %v165
    %167 = vmatprep.mubr.f32.mxu0 0.0
    %168 = vmatmul.mubr.f32.gmra.mxu0 %v31
    %v169 = vpop.f32.mrf.mxu0
    %v170 = vadd.f32 0.0, %v169
    %v171 = vpop.f32.mrf.mxu0
    %v172 = vadd.f32 0.0, %v171
    %173 = vmatprep.mubr.f32.mxu0 0.0
    %174 = vmatmul.mubr.f32.gmra.mxu0 %v32
    %v175 = vpop.f32.mrf.mxu0
    %v176 = vadd.f32 0.0, %v175
    %v177 = vpop.f32.mrf.mxu0
    %v178 = vadd.f32 0.0, %v177
    %179 = vmatprep.mubr.f32.mxu0 0.0
    %180 = vmatmul.mubr.f32.gmra.mxu0 %v33
    %v181 = vpop.f32.mrf.mxu0
    %v182 = vadd.f32 0.0, %v181
    %v183 = vpop.f32.mrf.mxu0
    %v184 = vadd.f32 0.0, %v183
    %185 = vmatprep.mubr.f32.mxu0 0.0
    %186 = vmatmul.mubr.f32.gmra.mxu0 %v34
    %v187 = vpop.f32.mrf.mxu0
    %v188 = vadd.f32 0.0, %v187
    %v189 = vpop.f32.mrf.mxu0
    %v190 = vadd.f32 0.0, %v189
    %191 = vmatprep.mubr.f32.mxu0 0.0
    %192 = vmatmul.mubr.f32.gmra.mxu0 %v35
    %v193 = vpop.f32.mrf.mxu0
    %v194 = vadd.f32 0.0, %v193
    %v195 = vpop.f32.mrf.mxu0
    %v196 = vadd.f32 0.0, %v195
    %197 = vmatprep.mubr.f32.mxu0 0.0
    %198 = vmatmul.mubr.f32.gmra.mxu0 %v36
    %v199 = vpop.f32.mrf.mxu0
    %v200 = vadd.f32 0.0, %v199
    %v201 = vpop.f32.mrf.mxu0
    %v202 = vadd.f32 0.0, %v201
    %203 = vmatprep.mubr.f32.mxu0 0.0
    %204 = vmatmul.mubr.f32.gmra.mxu0 %v37
    %v205 = vpop.f32.mrf.mxu0
    %v206 = vadd.f32 0.0, %v205
    %v207 = vpop.f32.mrf.mxu0
    %v208 = vadd.f32 0.0, %v207
    %209 = vmatprep.mubr.f32.mxu0 0.0
    %210 = vmatmul.mubr.f32.gmra.mxu0 %v38
    %v211 = vpop.f32.mrf.mxu0
    %v212 = vadd.f32 0.0, %v211
    %v213 = vpop.f32.mrf.mxu0
    %v214 = vadd.f32 0.0, %v213
    %215 = vmatprep.mubr.f32.mxu0 0.0
    %216 = vmatmul.mubr.f32.gmra.mxu0 %v39
    %v217 = vpop.f32.mrf.mxu0
    %v218 = vpop.f32.mrf.mxu0
    %v219 = vadd.f32 0.0, %v218
    %220 = vmatprep.mubr.f32.mxu0 0.0
    %221 = vmatmul.mubr.f32.gmra.mxu0 %v40
    %v222 = vpop.f32.mrf.mxu0
    %v223 = vpop.f32.mrf.mxu0
    %v224 = vadd.f32 0.0, %v223
    %225 = vmatprep.mubr.f32.mxu0 0.0
    %226 = vmatmul.mubr.f32.gmra.mxu0 %v41
    %v227 = vpop.f32.mrf.mxu0
    %v228 = vpop.f32.mrf.mxu0
    %v229 = vadd.f32 0.0, %v228
    %230 = vmatprep.mubr.f32.mxu0 0.0
    %231 = vmatmul.mubr.f32.gmra.mxu0 %v42
    %v232 = vpop.f32.mrf.mxu0
    %v233 = vpop.f32.mrf.mxu0
    %v234 = vadd.f32 0.0, %v233
    %235 = vmatprep.mubr.f32.mxu0 0.0
    %236 = vmatmul.mubr.f32.gmra.mxu0 %v43
    %v237 = vpop.f32.mrf.mxu0
    %v238 = vpop.f32.mrf.mxu0
    %v239 = vadd.f32 0.0, %v238
    %240 = vmatprep.mubr.f32.mxu0 0.0
    %241 = vmatmul.mubr.f32.gmra.mxu0 %v44
    %v242 = vpop.f32.mrf.mxu0
    %v243 = vpop.f32.mrf.mxu0
    %v244 = vadd.f32 0.0, %v243
    %245 = vmatprep.mubr.f32.mxu0 0.0
    %246 = vmatmul.mubr.f32.gmra.mxu0 %v45
    %v247 = vpop.f32.mrf.mxu0
    %v248 = vpop.f32.mrf.mxu0
    %v249 = vadd.f32 0.0, %v248
    %250 = vmatprep.mubr.f32.mxu0 0.0
    %251 = vmatmul.mubr.f32.gmra.mxu0 %v46
    %v252 = vpop.f32.mrf.mxu0
    %v253 = vpop.f32.mrf.mxu0
    %v254 = vadd.f32 0.0, %v253
    %255 = vmatprep.mubr.f32.mxu0 0.0
    %256 = vmatmul.mubr.f32.gmra.mxu0 %v47
    %v257 = vpop.f32.mrf.mxu0
    %v258 = vpop.f32.mrf.mxu0
    %v259 = vadd.f32 0.0, %v258
    %260 = vmatprep.mubr.f32.mxu0 0.0
    %261 = vmatmul.mubr.f32.gmra.mxu0 %v48
    %v262 = vpop.f32.mrf.mxu0
    %v263 = vpop.f32.mrf.mxu0
    %v264 = vadd.f32 0.0, %v263
    %265 = vmatprep.mubr.f32.mxu0 0.0
    %266 = vmatmul.mubr.f32.gmra.mxu0 %v49
    %v267 = vpop.f32.mrf.mxu0
    %v268 = vpop.f32.mrf.mxu0
    %v269 = vadd.f32 0.0, %v268
    %270 = vmatprep.mubr.f32.mxu0 0.0
    %271 = vmatmul.mubr.f32.gmra.mxu0 %v50
    %v272 = vpop.f32.mrf.mxu0
    %v273 = vpop.f32.mrf.mxu0
    %v274 = vadd.f32 0.0, %v273
    %275 = vmatprep.mubr.f32.mxu0 0.0
    %276 = vmatmul.mubr.f32.gmra.mxu0 %v51
    %v277 = vpop.f32.mrf.mxu0
    %v278 = vpop.f32.mrf.mxu0
    %v279 = vadd.f32 0.0, %v278
    %280 = vmatprep.mubr.f32.mxu0 0.0
    %281 = vmatmul.mubr.f32.gmra.mxu0 %v52
    %v282 = vpop.f32.mrf.mxu0
    %v283 = vpop.f32.mrf.mxu0
    %v284 = vadd.f32 0.0, %v283
    %285 = vmatprep.mubr.f32.mxu0 0.0
    %286 = vmatmul.mubr.f32.gmra.mxu0 %v53
    %v287 = vpop.f32.mrf.mxu0
    %v288 = vpop.f32.mrf.mxu0
    %v289 = vadd.f32 0.0, %v288
    %290 = vmatprep.mubr.f32.mxu0 0.0
    %291 = vmatmul.mubr.f32.gmra.mxu0 %v54
    %v292 = vpop.f32.mrf.mxu0
    %v293 = vpop.f32.mrf.mxu0
    %v294 = vadd.f32 0.0, %v293
    %295 = vdwg.mxu0
    %v296 = vmul.f32 %v23, %v23
    %v297 = vmul.f32 %v24, %v24
    %v298 = vmul.f32 %v25, %v25
    %v299 = vmul.f32 %v26, %v26
    %v300 = vmul.f32 %v27, %v27
    %v301 = vmul.f32 %v28, %v28
    %v302 = vmul.f32 %v29, %v29
    %v303 = vmul.f32 %v30, %v30
    %v304 = vmul.f32 %v31, %v31
    %v305 = vmul.f32 %v32, %v32
    %v306 = vmul.f32 %v33, %v33
    %v307 = vmul.f32 %v34, %v34
    %v308 = vmul.f32 %v35, %v35
    %v309 = vmul.f32 %v36, %v36
    %v310 = vmul.f32 %v37, %v37
    %v311 = vmul.f32 %v38, %v38
    %v312 = vmul.f32 %v39, %v39
    %v313 = vmul.f32 %v40, %v40
    %v314 = vmul.f32 %v41, %v41
    %v315 = vmul.f32 %v42, %v42
    %v316 = vmul.f32 %v43, %v43
    %v317 = vmul.f32 %v44, %v44
    %v318 = vmul.f32 %v45, %v45
    %v319 = vmul.f32 %v46, %v46
    %v320 = vmul.f32 %v47, %v47
    %v321 = vmul.f32 %v48, %v48
    %v322 = vmul.f32 %v49, %v49
    %v323 = vmul.f32 %v50, %v50
    %v324 = vmul.f32 %v51, %v51
    %v325 = vmul.f32 %v52, %v52
    %v326 = vmul.f32 %v53, %v53
    %v327 = vmul.f32 %v54, %v54
    %328 = vadd.xlane.f32.xlu0 %v296
    %v329 = vpop.xlane.xlu0 %328
    %330 = vadd.xlane.f32.xlu0 %v297
    %v331 = vpop.xlane.xlu0 %330
    %332 = vadd.xlane.f32.xlu0 %v298
    %v333 = vpop.xlane.xlu0 %332
    %334 = vadd.xlane.f32.xlu0 %v299
    %v335 = vpop.xlane.xlu0 %334
    %336 = vadd.xlane.f32.xlu0 %v300
    %v337 = vpop.xlane.xlu0 %336
    %338 = vadd.xlane.f32.xlu0 %v301
    %v339 = vpop.xlane.xlu0 %338
    %340 = vadd.xlane.f32.xlu0 %v302
    %v341 = vpop.xlane.xlu0 %340
    %342 = vadd.xlane.f32.xlu0 %v303
    %v343 = vpop.xlane.xlu0 %342
    %344 = vadd.xlane.f32.xlu0 %v304
    %v345 = vpop.xlane.xlu0 %344
    %346 = vadd.xlane.f32.xlu0 %v305
    %v347 = vpop.xlane.xlu0 %346
    %348 = vadd.xlane.f32.xlu0 %v306
    %v349 = vpop.xlane.xlu0 %348
    %350 = vadd.xlane.f32.xlu0 %v307
    %v351 = vpop.xlane.xlu0 %350
    %352 = vadd.xlane.f32.xlu0 %v308
    %v353 = vpop.xlane.xlu0 %352
    %354 = vadd.xlane.f32.xlu0 %v309
    %v355 = vpop.xlane.xlu0 %354
    %356 = vadd.xlane.f32.xlu0 %v310
    %v357 = vpop.xlane.xlu0 %356
    %358 = vadd.xlane.f32.xlu0 %v311
    %v359 = vpop.xlane.xlu0 %358
    %360 = vadd.xlane.f32.xlu0 %v312
    %v361 = vpop.xlane.xlu0 %360
    %362 = vadd.xlane.f32.xlu0 %v313
    %v363 = vpop.xlane.xlu0 %362
    %364 = vadd.xlane.f32.xlu0 %v314
    %v365 = vpop.xlane.xlu0 %364
    %366 = vadd.xlane.f32.xlu0 %v315
    %v367 = vpop.xlane.xlu0 %366
    %368 = vadd.xlane.f32.xlu0 %v316
    %v369 = vpop.xlane.xlu0 %368
    %370 = vadd.xlane.f32.xlu0 %v317
    %v371 = vpop.xlane.xlu0 %370
    %372 = vadd.xlane.f32.xlu0 %v318
    %v373 = vpop.xlane.xlu0 %372
    %374 = vadd.xlane.f32.xlu0 %v319
    %v375 = vpop.xlane.xlu0 %374
    %376 = vadd.xlane.f32.xlu0 %v320
    %v377 = vpop.xlane.xlu0 %376
    %378 = vadd.xlane.f32.xlu0 %v321
    %v379 = vpop.xlane.xlu0 %378
    %380 = vadd.xlane.f32.xlu0 %v322
    %v381 = vpop.xlane.xlu0 %380
    %382 = vadd.xlane.f32.xlu0 %v323
    %v383 = vpop.xlane.xlu0 %382
    %384 = vadd.xlane.f32.xlu0 %v324
    %v385 = vpop.xlane.xlu0 %384
    %386 = vadd.xlane.f32.xlu0 %v325
    %v387 = vpop.xlane.xlu0 %386
    %388 = vadd.xlane.f32.xlu0 %v326
    %v389 = vpop.xlane.xlu0 %388
    %390 = vadd.xlane.f32.xlu0 %v327
    %v391 = vpop.xlane.xlu0 %390
    %392 = vmatprep.subr.mxu0 0.0
    %393 = vmatpush1.xpose.msra.mxu0 %v311
    %394 = vmatprep.subr.mxu0 0.0
    %395 = vmatpush1.xpose.msra.mxu0 %v310
    %396 = vmatprep.subr.mxu0 0.0
    %397 = vmatpush1.xpose.msra.mxu0 %v309
    %398 = vmatprep.subr.mxu0 0.0
    %399 = vmatpush1.xpose.msra.mxu0 %v308
    %400 = vmatprep.subr.mxu0 0.0
    %401 = vmatpush1.xpose.msra.mxu0 %v307
    %402 = vmatprep.subr.mxu0 0.0
    %403 = vmatpush1.xpose.msra.mxu0 %v306
    %404 = vmatprep.subr.mxu0 0.0
    %405 = vmatpush1.xpose.msra.mxu0 %v305
    %406 = vmatprep.subr.mxu0 0.0
    %407 = vmatpush1.xpose.msra.mxu0 %v304
    %408 = vmatprep.subr.mxu0 0.0
    %409 = vmatpush1.xpose.msra.mxu0 %v303
    %410 = vmatprep.subr.mxu0 0.0
    %411 = vmatpush1.xpose.msra.mxu0 %v302
    %412 = vmatprep.subr.mxu0 0.0
    %413 = vmatpush1.xpose.msra.mxu0 %v301
    %414 = vmatprep.subr.mxu0 0.0
    %415 = vmatpush1.xpose.msra.mxu0 %v300
    %416 = vmatprep.subr.mxu0 0.0
    %417 = vmatpush1.xpose.msra.mxu0 %v299
    %418 = vmatprep.subr.mxu0 0.0
    %419 = vmatpush1.xpose.msra.mxu0 %v298
    %420 = vmatprep.subr.mxu0 0.0
    %421 = vmatpush1.xpose.msra.mxu0 %v297
    %422 = vmatprep.subr.mxu0 0.0
    %423 = vmatpush1.xpose.msra.mxu0 %v296
    %424 = vmatprep.subr.mxu0 0.0
    %425 = vmatpush2.xpose.msra.mxu0 %v327
    %426 = vmatprep.subr.mxu0 0.0
    %427 = vmatpush2.xpose.msra.mxu0 %v326
    %428 = vmatprep.subr.mxu0 0.0
    %429 = vmatpush2.xpose.msra.mxu0 %v325
    %430 = vmatprep.subr.mxu0 0.0
    %431 = vmatpush2.xpose.msra.mxu0 %v324
    %432 = vmatprep.subr.mxu0 0.0
    %433 = vmatpush2.xpose.msra.mxu0 %v323
    %434 = vmatprep.subr.mxu0 0.0
    %435 = vmatpush2.xpose.msra.mxu0 %v322
    %436 = vmatprep.subr.mxu0 0.0
    %437 = vmatpush2.xpose.msra.mxu0 %v321
    %438 = vmatprep.subr.mxu0 0.0
    %439 = vmatpush2.xpose.msra.mxu0 %v320
    %440 = vmatprep.subr.mxu0 0.0
    %441 = vmatpush2.xpose.msra.mxu0 %v319
    %442 = vmatprep.subr.mxu0 0.0
    %443 = vmatpush2.xpose.msra.mxu0 %v318
    %444 = vmatprep.subr.mxu0 0.0
    %445 = vmatpush2.xpose.msra.mxu0 %v317
    %446 = vmatprep.subr.mxu0 0.0
    %447 = vmatpush2.xpose.msra.mxu0 %v316
    %448 = vmatprep.subr.mxu0 0.0
    %449 = vmatpush2.xpose.msra.mxu0 %v315
    %450 = vmatprep.subr.mxu0 0.0
    %451 = vmatpush2.xpose.msra.mxu0 %v314
    %452 = vmatprep.subr.mxu0 0.0
    %453 = vmatpush2.xpose.msra.mxu0 %v313
    %454 = vmatprep.subr.mxu0 0.0
    %455 = vmatpush2.xpose.msra.mxu0 %v312
    %456 = vmatprep.mubr.f32.mxu0 0.0
    %457 = vmatmul.mubr.f32.gmra.mxu0 1.0
    %v458 = vpop.f32.mrf.mxu0
    %v459 = vadd.f32 0.0, %v458
    %v460 = vpop.f32.mrf.mxu0
    %v461 = vadd.f32 0.0, %v460
    %462 = vdwg.mxu0
    %v463 = vlaneseq
    %v464 = vshrl.u32 %v463, 7
    %v465 = vsub.s32 0, %v464
    %v466 = vrot.slane %v459, %v465
    %v467 = vadd.f32 %v329, %v466
    %v468 = vadd.f32 %v331, %v466
    %v469 = vadd.f32 %v333, %v466
    %v470 = vadd.f32 %v335, %v466
    %v471 = vadd.f32 %v337, %v466
    %v472 = vadd.f32 %v339, %v466
    %v473 = vadd.f32 %v341, %v466
    %v474 = vadd.f32 %v343, %v466
    %v475 = vadd.f32 %v345, %v466
    %v476 = vadd.f32 %v347, %v466
    %v477 = vadd.f32 %v349, %v466
    %v478 = vadd.f32 %v351, %v466
    %v479 = vadd.f32 %v353, %v466
    %v480 = vadd.f32 %v355, %v466
    %v481 = vadd.f32 %v357, %v466
    %v482 = vadd.f32 %v359, %v466
    %v483 = vmul.f32 %v122, 2.0
    %v484 = vmul.f32 %v128, 2.0
    %v485 = vmul.f32 %v134, 2.0
    %v486 = vmul.f32 %v140, 2.0
    %v487 = vmul.f32 %v146, 2.0
    %v488 = vmul.f32 %v152, 2.0
    %v489 = vmul.f32 %v158, 2.0
    %v490 = vmul.f32 %v164, 2.0
    %v491 = vmul.f32 %v170, 2.0
    %v492 = vmul.f32 %v176, 2.0
    %v493 = vmul.f32 %v182, 2.0
    %v494 = vmul.f32 %v188, 2.0
    %v495 = vmul.f32 %v194, 2.0
    %v496 = vmul.f32 %v200, 2.0
    %v497 = vmul.f32 %v206, 2.0
    %v498 = vmul.f32 %v212, 2.0
    %v499 = vsub.f32 %v467, %v483
    %v500 = vsub.f32 %v468, %v484
    %v501 = vsub.f32 %v469, %v485
    %v502 = vsub.f32 %v470, %v486
    %v503 = vsub.f32 %v471, %v487
    %v504 = vsub.f32 %v472, %v488
    %v505 = vsub.f32 %v473, %v489
    %v506 = vsub.f32 %v474, %v490
    %v507 = vsub.f32 %v475, %v491
    %v508 = vsub.f32 %v476, %v492
    %v509 = vsub.f32 %v477, %v493
    %v510 = vsub.f32 %v478, %v494
    %v511 = vsub.f32 %v479, %v495
    %v512 = vsub.f32 %v480, %v496
    %v513 = vsub.f32 %v481, %v497
    %v514 = vsub.f32 %v482, %v498
    %v515 = vmax.f32 %v499, 0.0
    %v516 = vmax.f32 %v500, 0.0
    %v517 = vmax.f32 %v501, 0.0
    %v518 = vmax.f32 %v502, 0.0
    %v519 = vmax.f32 %v503, 0.0
    %v520 = vmax.f32 %v504, 0.0
    %v521 = vmax.f32 %v505, 0.0
    %v522 = vmax.f32 %v506, 0.0
    %v523 = vmax.f32 %v507, 0.0
    %v524 = vmax.f32 %v508, 0.0
    %v525 = vmax.f32 %v509, 0.0
    %v526 = vmax.f32 %v510, 0.0
    %v527 = vmax.f32 %v511, 0.0
    %v528 = vmax.f32 %v512, 0.0
    %v529 = vmax.f32 %v513, 0.0
    %v530 = vmax.f32 %v514, 0.0
    %v531 = vmul.f32 %v515, -0.05
    %v532 = vmul.f32 %v516, -0.05
    %v533 = vmul.f32 %v517, -0.05
    %v534 = vmul.f32 %v518, -0.05
    %v535 = vmul.f32 %v519, -0.05
    %v536 = vmul.f32 %v520, -0.05
    %v537 = vmul.f32 %v521, -0.05
    %v538 = vmul.f32 %v522, -0.05
    %v539 = vmul.f32 %v523, -0.05
    %v540 = vmul.f32 %v524, -0.05
    %v541 = vmul.f32 %v525, -0.05
    %v542 = vmul.f32 %v526, -0.05
    %v543 = vmul.f32 %v527, -0.05
    %v544 = vmul.f32 %v528, -0.05
    %v545 = vmul.f32 %v529, -0.05
    %v546 = vmul.f32 %v530, -0.05
    %v547 = vmul.f32 %v531, 1.442695
    %v548 = vpow.pop %v547
    %v549 = vmul.f32 %v532, 1.442695
    %v550 = vpow.pop %v549
    %v551 = vmul.f32 %v533, 1.442695
    %v552 = vpow.pop %v551
    %v553 = vmul.f32 %v534, 1.442695
    %v554 = vpow.pop %v553
    %v555 = vmul.f32 %v535, 1.442695
    %v556 = vpow.pop %v555
    %v557 = vmul.f32 %v536, 1.442695
    %v558 = vpow.pop %v557
    %v559 = vmul.f32 %v537, 1.442695
    %v560 = vpow.pop %v559
    %v561 = vmul.f32 %v538, 1.442695
    %v562 = vpow.pop %v561
    %v563 = vmul.f32 %v539, 1.442695
    %v564 = vpow.pop %v563
    %v565 = vmul.f32 %v540, 1.442695
    %v566 = vpow.pop %v565
    %v567 = vmul.f32 %v541, 1.442695
    %v568 = vpow.pop %v567
    %v569 = vmul.f32 %v542, 1.442695
    %v570 = vpow.pop %v569
    %v571 = vmul.f32 %v543, 1.442695
    %v572 = vpow.pop %v571
    %v573 = vmul.f32 %v544, 1.442695
    %v574 = vpow.pop %v573
    %v575 = vmul.f32 %v545, 1.442695
    %v576 = vpow.pop %v575
    %v577 = vmul.f32 %v546, 1.442695
    %v578 = vpow.pop %v577
    %v579 = vadd.f32 %v548, 0.0
    %v580 = vadd.f32 %v550, 0.0
    %v581 = vadd.f32 %v552, 0.0
    %v582 = vadd.f32 %v554, 0.0
    %v583 = vadd.f32 %v556, 0.0
    %v584 = vadd.f32 %v558, 0.0
    %v585 = vadd.f32 %v560, 0.0
    %v586 = vadd.f32 %v562, 0.0
    %v587 = vadd.f32 %v564, 0.0
    %v588 = vadd.f32 %v566, 0.0
    %v589 = vadd.f32 %v568, 0.0
    %v590 = vadd.f32 %v570, 0.0
    %v591 = vadd.f32 %v572, 0.0
    %v592 = vadd.f32 %v574, 0.0
    %v593 = vadd.f32 %v576, 0.0
    %v594 = vadd.f32 %v578, 0.0
    %v595 = vmul.f32 %v515, -0.033333335
    %v596 = vmul.f32 %v516, -0.033333335
    %v597 = vmul.f32 %v517, -0.033333335
    %v598 = vmul.f32 %v518, -0.033333335
    %v599 = vmul.f32 %v519, -0.033333335
    %v600 = vmul.f32 %v520, -0.033333335
    %v601 = vmul.f32 %v521, -0.033333335
    %v602 = vmul.f32 %v522, -0.033333335
    %v603 = vmul.f32 %v523, -0.033333335
    %v604 = vmul.f32 %v524, -0.033333335
    %v605 = vmul.f32 %v525, -0.033333335
    %v606 = vmul.f32 %v526, -0.033333335
    %v607 = vmul.f32 %v527, -0.033333335
    %v608 = vmul.f32 %v528, -0.033333335
    %v609 = vmul.f32 %v529, -0.033333335
    %v610 = vmul.f32 %v530, -0.033333335
    %v611 = vmul.f32 %v595, 1.442695
    %v612 = vpow.pop %v611
    %v613 = vmul.f32 %v596, 1.442695
    %v614 = vpow.pop %v613
    %v615 = vmul.f32 %v597, 1.442695
    %v616 = vpow.pop %v615
    %v617 = vmul.f32 %v598, 1.442695
    %v618 = vpow.pop %v617
    %v619 = vmul.f32 %v599, 1.442695
    %v620 = vpow.pop %v619
    %v621 = vmul.f32 %v600, 1.442695
    %v622 = vpow.pop %v621
    %v623 = vmul.f32 %v601, 1.442695
    %v624 = vpow.pop %v623
    %v625 = vmul.f32 %v602, 1.442695
    %v626 = vpow.pop %v625
    %v627 = vmul.f32 %v603, 1.442695
    %v628 = vpow.pop %v627
    %v629 = vmul.f32 %v604, 1.442695
    %v630 = vpow.pop %v629
    %v631 = vmul.f32 %v605, 1.442695
    %v632 = vpow.pop %v631
    %v633 = vmul.f32 %v606, 1.442695
    %v634 = vpow.pop %v633
    %v635 = vmul.f32 %v607, 1.442695
    %v636 = vpow.pop %v635
    %v637 = vmul.f32 %v608, 1.442695
    %v638 = vpow.pop %v637
    %v639 = vmul.f32 %v609, 1.442695
    %v640 = vpow.pop %v639
    %v641 = vmul.f32 %v610, 1.442695
    %v642 = vpow.pop %v641
    %v643 = vadd.f32 %v579, %v612
    %v644 = vadd.f32 %v580, %v614
    %v645 = vadd.f32 %v581, %v616
    %v646 = vadd.f32 %v582, %v618
    %v647 = vadd.f32 %v583, %v620
    %v648 = vadd.f32 %v584, %v622
    %v649 = vadd.f32 %v585, %v624
    %v650 = vadd.f32 %v586, %v626
    %v651 = vadd.f32 %v587, %v628
    %v652 = vadd.f32 %v588, %v630
    %v653 = vadd.f32 %v589, %v632
    %v654 = vadd.f32 %v590, %v634
    %v655 = vadd.f32 %v591, %v636
    %v656 = vadd.f32 %v592, %v638
    %v657 = vadd.f32 %v593, %v640
    %v658 = vadd.f32 %v594, %v642
    %v659 = vmul.f32 %v515, -0.025
    %v660 = vmul.f32 %v516, -0.025
    %v661 = vmul.f32 %v517, -0.025
    %v662 = vmul.f32 %v518, -0.025
    %v663 = vmul.f32 %v519, -0.025
    %v664 = vmul.f32 %v520, -0.025
    %v665 = vmul.f32 %v521, -0.025
    %v666 = vmul.f32 %v522, -0.025
    %v667 = vmul.f32 %v523, -0.025
    %v668 = vmul.f32 %v524, -0.025
    %v669 = vmul.f32 %v525, -0.025
    %v670 = vmul.f32 %v526, -0.025
    %v671 = vmul.f32 %v527, -0.025
    %v672 = vmul.f32 %v528, -0.025
    %v673 = vmul.f32 %v529, -0.025
    %v674 = vmul.f32 %v530, -0.025
    %v675 = vmul.f32 %v659, 1.442695
    %v676 = vpow.pop %v675
    %v677 = vmul.f32 %v660, 1.442695
    %v678 = vpow.pop %v677
    %v679 = vmul.f32 %v661, 1.442695
    %v680 = vpow.pop %v679
    %v681 = vmul.f32 %v662, 1.442695
    %v682 = vpow.pop %v681
    %v683 = vmul.f32 %v663, 1.442695
    %v684 = vpow.pop %v683
    %v685 = vmul.f32 %v664, 1.442695
    %v686 = vpow.pop %v685
    %v687 = vmul.f32 %v665, 1.442695
    %v688 = vpow.pop %v687
    %v689 = vmul.f32 %v666, 1.442695
    %v690 = vpow.pop %v689
    %v691 = vmul.f32 %v667, 1.442695
    %v692 = vpow.pop %v691
    %v693 = vmul.f32 %v668, 1.442695
    %v694 = vpow.pop %v693
    %v695 = vmul.f32 %v669, 1.442695
    %v696 = vpow.pop %v695
    %v697 = vmul.f32 %v670, 1.442695
    %v698 = vpow.pop %v697
    %v699 = vmul.f32 %v671, 1.442695
    %v700 = vpow.pop %v699
    %v701 = vmul.f32 %v672, 1.442695
    %v702 = vpow.pop %v701
    %v703 = vmul.f32 %v673, 1.442695
    %v704 = vpow.pop %v703
    %v705 = vmul.f32 %v674, 1.442695
    %v706 = vpow.pop %v705
    %v707 = vadd.f32 %v643, %v676
    %v708 = vadd.f32 %v644, %v678
    %v709 = vadd.f32 %v645, %v680
    %v710 = vadd.f32 %v646, %v682
    %v711 = vadd.f32 %v647, %v684
    %v712 = vadd.f32 %v648, %v686
    %v713 = vadd.f32 %v649, %v688
    %v714 = vadd.f32 %v650, %v690
    %v715 = vadd.f32 %v651, %v692
    %v716 = vadd.f32 %v652, %v694
    %v717 = vadd.f32 %v653, %v696
    %v718 = vadd.f32 %v654, %v698
    %v719 = vadd.f32 %v655, %v700
    %v720 = vadd.f32 %v656, %v702
    %v721 = vadd.f32 %v657, %v704
    %v722 = vadd.f32 %v658, %v706
    %v723 = vmul.f32 %v515, -0.01
    %v724 = vmul.f32 %v516, -0.01
    %v725 = vmul.f32 %v517, -0.01
    %v726 = vmul.f32 %v518, -0.01
    %v727 = vmul.f32 %v519, -0.01
    %v728 = vmul.f32 %v520, -0.01
    %v729 = vmul.f32 %v521, -0.01
    %v730 = vmul.f32 %v522, -0.01
    %v731 = vmul.f32 %v523, -0.01
    %v732 = vmul.f32 %v524, -0.01
    %v733 = vmul.f32 %v525, -0.01
    %v734 = vmul.f32 %v526, -0.01
    %v735 = vmul.f32 %v527, -0.01
    %v736 = vmul.f32 %v528, -0.01
    %v737 = vmul.f32 %v529, -0.01
    %v738 = vmul.f32 %v530, -0.01
    %v739 = vmul.f32 %v723, 1.442695
    %v740 = vpow.pop %v739
    %v741 = vmul.f32 %v724, 1.442695
    %v742 = vpow.pop %v741
    %v743 = vmul.f32 %v725, 1.442695
    %v744 = vpow.pop %v743
    %v745 = vmul.f32 %v726, 1.442695
    %v746 = vpow.pop %v745
    %v747 = vmul.f32 %v727, 1.442695
    %v748 = vpow.pop %v747
    %v749 = vmul.f32 %v728, 1.442695
    %v750 = vpow.pop %v749
    %v751 = vmul.f32 %v729, 1.442695
    %v752 = vpow.pop %v751
    %v753 = vmul.f32 %v730, 1.442695
    %v754 = vpow.pop %v753
    %v755 = vmul.f32 %v731, 1.442695
    %v756 = vpow.pop %v755
    %v757 = vmul.f32 %v732, 1.442695
    %v758 = vpow.pop %v757
    %v759 = vmul.f32 %v733, 1.442695
    %v760 = vpow.pop %v759
    %v761 = vmul.f32 %v734, 1.442695
    %v762 = vpow.pop %v761
    %v763 = vmul.f32 %v735, 1.442695
    %v764 = vpow.pop %v763
    %v765 = vmul.f32 %v736, 1.442695
    %v766 = vpow.pop %v765
    %v767 = vmul.f32 %v737, 1.442695
    %v768 = vpow.pop %v767
    %v769 = vmul.f32 %v738, 1.442695
    %v770 = vpow.pop %v769
    %v771 = vadd.f32 %v707, %v740
    %v772 = vadd.f32 %v708, %v742
    %v773 = vadd.f32 %v709, %v744
    %v774 = vadd.f32 %v710, %v746
    %v775 = vadd.f32 %v711, %v748
    %v776 = vadd.f32 %v712, %v750
    %v777 = vadd.f32 %v713, %v752
    %v778 = vadd.f32 %v714, %v754
    %v779 = vadd.f32 %v715, %v756
    %v780 = vadd.f32 %v716, %v758
    %v781 = vadd.f32 %v717, %v760
    %v782 = vadd.f32 %v718, %v762
    %v783 = vadd.f32 %v719, %v764
    %v784 = vadd.f32 %v720, %v766
    %v785 = vadd.f32 %v721, %v768
    %v786 = vadd.f32 %v722, %v770
    %787 = vadd.xlane.f32.xlu0 %v771
    %v788 = vpop.xlane.xlu0 %787
    %789 = vadd.xlane.f32.xlu0 %v772
    %v790 = vpop.xlane.xlu0 %789
    %791 = vadd.xlane.f32.xlu0 %v773
    %v792 = vpop.xlane.xlu0 %791
    %793 = vadd.xlane.f32.xlu0 %v774
    %v794 = vpop.xlane.xlu0 %793
    %795 = vadd.xlane.f32.xlu0 %v775
    %v796 = vpop.xlane.xlu0 %795
    %797 = vadd.xlane.f32.xlu0 %v776
    %v798 = vpop.xlane.xlu0 %797
    %799 = vadd.xlane.f32.xlu0 %v777
    %v800 = vpop.xlane.xlu0 %799
    %801 = vadd.xlane.f32.xlu0 %v778
    %v802 = vpop.xlane.xlu0 %801
    %803 = vadd.xlane.f32.xlu0 %v779
    %v804 = vpop.xlane.xlu0 %803
    %805 = vadd.xlane.f32.xlu0 %v780
    %v806 = vpop.xlane.xlu0 %805
    %807 = vadd.xlane.f32.xlu0 %v781
    %v808 = vpop.xlane.xlu0 %807
    %809 = vadd.xlane.f32.xlu0 %v782
    %v810 = vpop.xlane.xlu0 %809
    %811 = vadd.xlane.f32.xlu0 %v783
    %v812 = vpop.xlane.xlu0 %811
    %813 = vadd.xlane.f32.xlu0 %v784
    %v814 = vpop.xlane.xlu0 %813
    %815 = vadd.xlane.f32.xlu0 %v785
    %v816 = vpop.xlane.xlu0 %815
    %817 = vadd.xlane.f32.xlu0 %v786
    %v818 = vpop.xlane.xlu0 %817
    %v819 = vadd.f32 %v788, %v790
    %v820 = vadd.f32 %v819, %v792
    %v821 = vadd.f32 %v820, %v794
    %v822 = vadd.f32 %v821, %v796
    %v823 = vadd.f32 %v822, %v798
    %v824 = vadd.f32 %v823, %v800
    %v825 = vadd.f32 %v824, %v802
    %v826 = vadd.f32 %v825, %v804
    %v827 = vadd.f32 %v826, %v806
    %v828 = vadd.f32 %v827, %v808
    %v829 = vadd.f32 %v828, %v810
    %v830 = vadd.f32 %v829, %v812
    %v831 = vadd.f32 %v830, %v814
    %v832 = vadd.f32 %v831, %v816
    %v833 = vadd.f32 %v832, %v818
    %v834 = vrot.slane %v833, 4
    %v835 = vadd.f32 %v833, %v834
    %v836 = vrot.slane %v835, 2
    %v837 = vadd.f32 %v835, %v836
    %v838 = vrot.slane %v837, 1
    %v839 = vadd.f32 %v837, %v838
    %v840 = vlaneseq
    %v841 = vshrl.u32 %v840, 7
    %v842 = vsub.s32 0, %v841
    %v843 = vrot.slane %v461, %v842
    %v844 = vadd.f32 %v361, %v843
    %v845 = vadd.f32 %v363, %v843
    %v846 = vadd.f32 %v365, %v843
    %v847 = vadd.f32 %v367, %v843
    %v848 = vadd.f32 %v369, %v843
    %v849 = vadd.f32 %v371, %v843
    %v850 = vadd.f32 %v373, %v843
    %v851 = vadd.f32 %v375, %v843
    %v852 = vadd.f32 %v377, %v843
    %v853 = vadd.f32 %v379, %v843
    %v854 = vadd.f32 %v381, %v843
    %v855 = vadd.f32 %v383, %v843
    %v856 = vadd.f32 %v385, %v843
    %v857 = vadd.f32 %v387, %v843
    %v858 = vadd.f32 %v389, %v843
    %v859 = vadd.f32 %v391, %v843
    %v860 = vmul.f32 %v219, 2.0
    %v861 = vmul.f32 %v224, 2.0
    %v862 = vmul.f32 %v229, 2.0
    %v863 = vmul.f32 %v234, 2.0
    %v864 = vmul.f32 %v239, 2.0
    %v865 = vmul.f32 %v244, 2.0
    %v866 = vmul.f32 %v249, 2.0
    %v867 = vmul.f32 %v254, 2.0
    %v868 = vmul.f32 %v259, 2.0
    %v869 = vmul.f32 %v264, 2.0
    %v870 = vmul.f32 %v269, 2.0
    %v871 = vmul.f32 %v274, 2.0
    %v872 = vmul.f32 %v279, 2.0
    %v873 = vmul.f32 %v284, 2.0
    %v874 = vmul.f32 %v289, 2.0
    %v875 = vmul.f32 %v294, 2.0
    %v876 = vsub.f32 %v844, %v860
    %v877 = vsub.f32 %v845, %v861
    %v878 = vsub.f32 %v846, %v862
    %v879 = vsub.f32 %v847, %v863
    %v880 = vsub.f32 %v848, %v864
    %v881 = vsub.f32 %v849, %v865
    %v882 = vsub.f32 %v850, %v866
    %v883 = vsub.f32 %v851, %v867
    %v884 = vsub.f32 %v852, %v868
    %v885 = vsub.f32 %v853, %v869
    %v886 = vsub.f32 %v854, %v870
    %v887 = vsub.f32 %v855, %v871
    %v888 = vsub.f32 %v856, %v872
    %v889 = vsub.f32 %v857, %v873
    %v890 = vsub.f32 %v858, %v874
    %v891 = vsub.f32 %v859, %v875
    %v892 = vmax.f32 %v876, 0.0
    %v893 = vmax.f32 %v877, 0.0
    %v894 = vmax.f32 %v878, 0.0
    %v895 = vmax.f32 %v879, 0.0
    %v896 = vmax.f32 %v880, 0.0
    %v897 = vmax.f32 %v881, 0.0
    %v898 = vmax.f32 %v882, 0.0
    %v899 = vmax.f32 %v883, 0.0
    %v900 = vmax.f32 %v884, 0.0
    %v901 = vmax.f32 %v885, 0.0
    %v902 = vmax.f32 %v886, 0.0
    %v903 = vmax.f32 %v887, 0.0
    %v904 = vmax.f32 %v888, 0.0
    %v905 = vmax.f32 %v889, 0.0
    %v906 = vmax.f32 %v890, 0.0
    %v907 = vmax.f32 %v891, 0.0
    %v908 = vmul.f32 %v892, -0.05
    %v909 = vmul.f32 %v893, -0.05
    %v910 = vmul.f32 %v894, -0.05
    %v911 = vmul.f32 %v895, -0.05
    %v912 = vmul.f32 %v896, -0.05
    %v913 = vmul.f32 %v897, -0.05
    %v914 = vmul.f32 %v898, -0.05
    %v915 = vmul.f32 %v899, -0.05
    %v916 = vmul.f32 %v900, -0.05
    %v917 = vmul.f32 %v901, -0.05
    %v918 = vmul.f32 %v902, -0.05
    %v919 = vmul.f32 %v903, -0.05
    %v920 = vmul.f32 %v904, -0.05
    %v921 = vmul.f32 %v905, -0.05
    %v922 = vmul.f32 %v906, -0.05
    %v923 = vmul.f32 %v907, -0.05
    %v924 = vmul.f32 %v908, 1.442695
    %v925 = vpow.pop %v924
    %v926 = vmul.f32 %v909, 1.442695
    %v927 = vpow.pop %v926
    %v928 = vmul.f32 %v910, 1.442695
    %v929 = vpow.pop %v928
    %v930 = vmul.f32 %v911, 1.442695
    %v931 = vpow.pop %v930
    %v932 = vmul.f32 %v912, 1.442695
    %v933 = vpow.pop %v932
    %v934 = vmul.f32 %v913, 1.442695
    %v935 = vpow.pop %v934
    %v936 = vmul.f32 %v914, 1.442695
    %v937 = vpow.pop %v936
    %v938 = vmul.f32 %v915, 1.442695
    %v939 = vpow.pop %v938
    %v940 = vmul.f32 %v916, 1.442695
    %v941 = vpow.pop %v940
    %v942 = vmul.f32 %v917, 1.442695
    %v943 = vpow.pop %v942
    %v944 = vmul.f32 %v918, 1.442695
    %v945 = vpow.pop %v944
    %v946 = vmul.f32 %v919, 1.442695
    %v947 = vpow.pop %v946
    %v948 = vmul.f32 %v920, 1.442695
    %v949 = vpow.pop %v948
    %v950 = vmul.f32 %v921, 1.442695
    %v951 = vpow.pop %v950
    %v952 = vmul.f32 %v922, 1.442695
    %v953 = vpow.pop %v952
    %v954 = vmul.f32 %v923, 1.442695
    %v955 = vpow.pop %v954
    %v956 = vadd.f32 %v925, 0.0
    %v957 = vadd.f32 %v927, 0.0
    %v958 = vadd.f32 %v929, 0.0
    %v959 = vadd.f32 %v931, 0.0
    %v960 = vadd.f32 %v933, 0.0
    %v961 = vadd.f32 %v935, 0.0
    %v962 = vadd.f32 %v937, 0.0
    %v963 = vadd.f32 %v939, 0.0
    %v964 = vadd.f32 %v941, 0.0
    %v965 = vadd.f32 %v943, 0.0
    %v966 = vadd.f32 %v945, 0.0
    %v967 = vadd.f32 %v947, 0.0
    %v968 = vadd.f32 %v949, 0.0
    %v969 = vadd.f32 %v951, 0.0
    %v970 = vadd.f32 %v953, 0.0
    %v971 = vadd.f32 %v955, 0.0
    %v972 = vmul.f32 %v892, -0.033333335
    %v973 = vmul.f32 %v893, -0.033333335
    %v974 = vmul.f32 %v894, -0.033333335
    %v975 = vmul.f32 %v895, -0.033333335
    %v976 = vmul.f32 %v896, -0.033333335
    %v977 = vmul.f32 %v897, -0.033333335
    %v978 = vmul.f32 %v898, -0.033333335
    %v979 = vmul.f32 %v899, -0.033333335
    %v980 = vmul.f32 %v900, -0.033333335
    %v981 = vmul.f32 %v901, -0.033333335
    %v982 = vmul.f32 %v902, -0.033333335
    %v983 = vmul.f32 %v903, -0.033333335
    %v984 = vmul.f32 %v904, -0.033333335
    %v985 = vmul.f32 %v905, -0.033333335
    %v986 = vmul.f32 %v906, -0.033333335
    %v987 = vmul.f32 %v907, -0.033333335
    %v988 = vmul.f32 %v972, 1.442695
    %v989 = vpow.pop %v988
    %v990 = vmul.f32 %v973, 1.442695
    %v991 = vpow.pop %v990
    %v992 = vmul.f32 %v974, 1.442695
    %v993 = vpow.pop %v992
    %v994 = vmul.f32 %v975, 1.442695
    %v995 = vpow.pop %v994
    %v996 = vmul.f32 %v976, 1.442695
    %v997 = vpow.pop %v996
    %v998 = vmul.f32 %v977, 1.442695
    %v999 = vpow.pop %v998
    %v1000 = vmul.f32 %v978, 1.442695
    %v1001 = vpow.pop %v1000
    %v1002 = vmul.f32 %v979, 1.442695
    %v1003 = vpow.pop %v1002
    %v1004 = vmul.f32 %v980, 1.442695
    %v1005 = vpow.pop %v1004
    %v1006 = vmul.f32 %v981, 1.442695
    %v1007 = vpow.pop %v1006
    %v1008 = vmul.f32 %v982, 1.442695
    %v1009 = vpow.pop %v1008
    %v1010 = vmul.f32 %v983, 1.442695
    %v1011 = vpow.pop %v1010
    %v1012 = vmul.f32 %v984, 1.442695
    %v1013 = vpow.pop %v1012
    %v1014 = vmul.f32 %v985, 1.442695
    %v1015 = vpow.pop %v1014
    %v1016 = vmul.f32 %v986, 1.442695
    %v1017 = vpow.pop %v1016
    %v1018 = vmul.f32 %v987, 1.442695
    %v1019 = vpow.pop %v1018
    %v1020 = vadd.f32 %v956, %v989
    %v1021 = vadd.f32 %v957, %v991
    %v1022 = vadd.f32 %v958, %v993
    %v1023 = vadd.f32 %v959, %v995
    %v1024 = vadd.f32 %v960, %v997
    %v1025 = vadd.f32 %v961, %v999
    %v1026 = vadd.f32 %v962, %v1001
    %v1027 = vadd.f32 %v963, %v1003
    %v1028 = vadd.f32 %v964, %v1005
    %v1029 = vadd.f32 %v965, %v1007
    %v1030 = vadd.f32 %v966, %v1009
    %v1031 = vadd.f32 %v967, %v1011
    %v1032 = vadd.f32 %v968, %v1013
    %v1033 = vadd.f32 %v969, %v1015
    %v1034 = vadd.f32 %v970, %v1017
    %v1035 = vadd.f32 %v971, %v1019
    %v1036 = vmul.f32 %v892, -0.025
    %v1037 = vmul.f32 %v893, -0.025
    %v1038 = vmul.f32 %v894, -0.025
    %v1039 = vmul.f32 %v895, -0.025
    %v1040 = vmul.f32 %v896, -0.025
    %v1041 = vmul.f32 %v897, -0.025
    %v1042 = vmul.f32 %v898, -0.025
    %v1043 = vmul.f32 %v899, -0.025
    %v1044 = vmul.f32 %v900, -0.025
    %v1045 = vmul.f32 %v901, -0.025
    %v1046 = vmul.f32 %v902, -0.025
    %v1047 = vmul.f32 %v903, -0.025
    %v1048 = vmul.f32 %v904, -0.025
    %v1049 = vmul.f32 %v905, -0.025
    %v1050 = vmul.f32 %v906, -0.025
    %v1051 = vmul.f32 %v907, -0.025
    %v1052 = vmul.f32 %v1036, 1.442695
    %v1053 = vpow.pop %v1052
    %v1054 = vmul.f32 %v1037, 1.442695
    %v1055 = vpow.pop %v1054
    %v1056 = vmul.f32 %v1038, 1.442695
    %v1057 = vpow.pop %v1056
    %v1058 = vmul.f32 %v1039, 1.442695
    %v1059 = vpow.pop %v1058
    %v1060 = vmul.f32 %v1040, 1.442695
    %v1061 = vpow.pop %v1060
    %v1062 = vmul.f32 %v1041, 1.442695
    %v1063 = vpow.pop %v1062
    %v1064 = vmul.f32 %v1042, 1.442695
    %v1065 = vpow.pop %v1064
    %v1066 = vmul.f32 %v1043, 1.442695
    %v1067 = vpow.pop %v1066
    %v1068 = vmul.f32 %v1044, 1.442695
    %v1069 = vpow.pop %v1068
    %v1070 = vmul.f32 %v1045, 1.442695
    %v1071 = vpow.pop %v1070
    %v1072 = vmul.f32 %v1046, 1.442695
    %v1073 = vpow.pop %v1072
    %v1074 = vmul.f32 %v1047, 1.442695
    %v1075 = vpow.pop %v1074
    %v1076 = vmul.f32 %v1048, 1.442695
    %v1077 = vpow.pop %v1076
    %v1078 = vmul.f32 %v1049, 1.442695
    %v1079 = vpow.pop %v1078
    %v1080 = vmul.f32 %v1050, 1.442695
    %v1081 = vpow.pop %v1080
    %v1082 = vmul.f32 %v1051, 1.442695
    %v1083 = vpow.pop %v1082
    %v1084 = vadd.f32 %v1020, %v1053
    %v1085 = vadd.f32 %v1021, %v1055
    %v1086 = vadd.f32 %v1022, %v1057
    %v1087 = vadd.f32 %v1023, %v1059
    %v1088 = vadd.f32 %v1024, %v1061
    %v1089 = vadd.f32 %v1025, %v1063
    %v1090 = vadd.f32 %v1026, %v1065
    %v1091 = vadd.f32 %v1027, %v1067
    %v1092 = vadd.f32 %v1028, %v1069
    %v1093 = vadd.f32 %v1029, %v1071
    %v1094 = vadd.f32 %v1030, %v1073
    %v1095 = vadd.f32 %v1031, %v1075
    %v1096 = vadd.f32 %v1032, %v1077
    %v1097 = vadd.f32 %v1033, %v1079
    %v1098 = vadd.f32 %v1034, %v1081
    %v1099 = vadd.f32 %v1035, %v1083
    %v1100 = vmul.f32 %v892, -0.01
    %v1101 = vmul.f32 %v893, -0.01
    %v1102 = vmul.f32 %v894, -0.01
    %v1103 = vmul.f32 %v895, -0.01
    %v1104 = vmul.f32 %v896, -0.01
    %v1105 = vmul.f32 %v897, -0.01
    %v1106 = vmul.f32 %v898, -0.01
    %v1107 = vmul.f32 %v899, -0.01
    %v1108 = vmul.f32 %v900, -0.01
    %v1109 = vmul.f32 %v901, -0.01
    %v1110 = vmul.f32 %v902, -0.01
    %v1111 = vmul.f32 %v903, -0.01
    %v1112 = vmul.f32 %v904, -0.01
    %v1113 = vmul.f32 %v905, -0.01
    %v1114 = vmul.f32 %v906, -0.01
    %v1115 = vmul.f32 %v907, -0.01
    %v1116 = vmul.f32 %v1100, 1.442695
    %v1117 = vpow.pop %v1116
    %v1118 = vmul.f32 %v1101, 1.442695
    %v1119 = vpow.pop %v1118
    %v1120 = vmul.f32 %v1102, 1.442695
    %v1121 = vpow.pop %v1120
    %v1122 = vmul.f32 %v1103, 1.442695
    %v1123 = vpow.pop %v1122
    %v1124 = vmul.f32 %v1104, 1.442695
    %v1125 = vpow.pop %v1124
    %v1126 = vmul.f32 %v1105, 1.442695
    %v1127 = vpow.pop %v1126
    %v1128 = vmul.f32 %v1106, 1.442695
    %v1129 = vpow.pop %v1128
    %v1130 = vmul.f32 %v1107, 1.442695
    %v1131 = vpow.pop %v1130
    %v1132 = vmul.f32 %v1108, 1.442695
    %v1133 = vpow.pop %v1132
    %v1134 = vmul.f32 %v1109, 1.442695
    %v1135 = vpow.pop %v1134
    %v1136 = vmul.f32 %v1110, 1.442695
    %v1137 = vpow.pop %v1136
    %v1138 = vmul.f32 %v1111, 1.442695
    %v1139 = vpow.pop %v1138
    %v1140 = vmul.f32 %v1112, 1.442695
    %v1141 = vpow.pop %v1140
    %v1142 = vmul.f32 %v1113, 1.442695
    %v1143 = vpow.pop %v1142
    %v1144 = vmul.f32 %v1114, 1.442695
    %v1145 = vpow.pop %v1144
    %v1146 = vmul.f32 %v1115, 1.442695
    %v1147 = vpow.pop %v1146
    %v1148 = vadd.f32 %v1084, %v1117
    %v1149 = vadd.f32 %v1085, %v1119
    %v1150 = vadd.f32 %v1086, %v1121
    %v1151 = vadd.f32 %v1087, %v1123
    %v1152 = vadd.f32 %v1088, %v1125
    %v1153 = vadd.f32 %v1089, %v1127
    %v1154 = vadd.f32 %v1090, %v1129
    %v1155 = vadd.f32 %v1091, %v1131
    %v1156 = vadd.f32 %v1092, %v1133
    %v1157 = vadd.f32 %v1093, %v1135
    %v1158 = vadd.f32 %v1094, %v1137
    %v1159 = vadd.f32 %v1095, %v1139
    %v1160 = vadd.f32 %v1096, %v1141
    %v1161 = vadd.f32 %v1097, %v1143
    %v1162 = vadd.f32 %v1098, %v1145
    %v1163 = vadd.f32 %v1099, %v1147
    %1164 = vadd.xlane.f32.xlu0 %v1148
    %v1165 = vpop.xlane.xlu0 %1164
    %1166 = vadd.xlane.f32.xlu0 %v1149
    %v1167 = vpop.xlane.xlu0 %1166
    %1168 = vadd.xlane.f32.xlu0 %v1150
    %v1169 = vpop.xlane.xlu0 %1168
    %1170 = vadd.xlane.f32.xlu0 %v1151
    %v1171 = vpop.xlane.xlu0 %1170
    %1172 = vadd.xlane.f32.xlu0 %v1152
    %v1173 = vpop.xlane.xlu0 %1172
    %1174 = vadd.xlane.f32.xlu0 %v1153
    %v1175 = vpop.xlane.xlu0 %1174
    %1176 = vadd.xlane.f32.xlu0 %v1154
    %v1177 = vpop.xlane.xlu0 %1176
    %1178 = vadd.xlane.f32.xlu0 %v1155
    %v1179 = vpop.xlane.xlu0 %1178
    %1180 = vadd.xlane.f32.xlu0 %v1156
    %v1181 = vpop.xlane.xlu0 %1180
    %1182 = vadd.xlane.f32.xlu0 %v1157
    %v1183 = vpop.xlane.xlu0 %1182
    %1184 = vadd.xlane.f32.xlu0 %v1158
    %v1185 = vpop.xlane.xlu0 %1184
    %1186 = vadd.xlane.f32.xlu0 %v1159
    %v1187 = vpop.xlane.xlu0 %1186
    %1188 = vadd.xlane.f32.xlu0 %v1160
    %v1189 = vpop.xlane.xlu0 %1188
    %1190 = vadd.xlane.f32.xlu0 %v1161
    %v1191 = vpop.xlane.xlu0 %1190
    %1192 = vadd.xlane.f32.xlu0 %v1162
    %v1193 = vpop.xlane.xlu0 %1192
    %1194 = vadd.xlane.f32.xlu0 %v1163
    %v1195 = vpop.xlane.xlu0 %1194
    %v1196 = vadd.f32 %v1165, %v1167
    %v1197 = vadd.f32 %v1196, %v1169
    %v1198 = vadd.f32 %v1197, %v1171
    %v1199 = vadd.f32 %v1198, %v1173
    %v1200 = vadd.f32 %v1199, %v1175
    %v1201 = vadd.f32 %v1200, %v1177
    %v1202 = vadd.f32 %v1201, %v1179
    %v1203 = vadd.f32 %v1202, %v1181
    %v1204 = vadd.f32 %v1203, %v1183
    %v1205 = vadd.f32 %v1204, %v1185
    %v1206 = vadd.f32 %v1205, %v1187
    %v1207 = vadd.f32 %v1206, %v1189
    %v1208 = vadd.f32 %v1207, %v1191
    %v1209 = vadd.f32 %v1208, %v1193
    %v1210 = vadd.f32 %v1209, %v1195
    %v1211 = vrot.slane %v1210, 4
    %v1212 = vadd.f32 %v1210, %v1211
    %v1213 = vrot.slane %v1212, 2
    %v1214 = vadd.f32 %v1212, %v1213
    %v1215 = vrot.slane %v1214, 1
    %v1216 = vadd.f32 %v1214, %v1215
    %v1217 = vadd.f32 %v839, %v1216
    %v1218 = vadd.f32 %v329, %v843
    %v1219 = vadd.f32 %v331, %v843
    %v1220 = vadd.f32 %v333, %v843
    %v1221 = vadd.f32 %v335, %v843
    %v1222 = vadd.f32 %v337, %v843
    %v1223 = vadd.f32 %v339, %v843
    %v1224 = vadd.f32 %v341, %v843
    %v1225 = vadd.f32 %v343, %v843
    %v1226 = vadd.f32 %v345, %v843
    %v1227 = vadd.f32 %v347, %v843
    %v1228 = vadd.f32 %v349, %v843
    %v1229 = vadd.f32 %v351, %v843
    %v1230 = vadd.f32 %v353, %v843
    %v1231 = vadd.f32 %v355, %v843
    %v1232 = vadd.f32 %v357, %v843
    %v1233 = vadd.f32 %v359, %v843
    %v1234 = vmul.f32 %v124, 2.0
    %v1235 = vmul.f32 %v130, 2.0
    %v1236 = vmul.f32 %v136, 2.0
    %v1237 = vmul.f32 %v142, 2.0
    %v1238 = vmul.f32 %v148, 2.0
    %v1239 = vmul.f32 %v154, 2.0
    %v1240 = vmul.f32 %v160, 2.0
    %v1241 = vmul.f32 %v166, 2.0
    %v1242 = vmul.f32 %v172, 2.0
    %v1243 = vmul.f32 %v178, 2.0
    %v1244 = vmul.f32 %v184, 2.0
    %v1245 = vmul.f32 %v190, 2.0
    %v1246 = vmul.f32 %v196, 2.0
    %v1247 = vmul.f32 %v202, 2.0
    %v1248 = vmul.f32 %v208, 2.0
    %v1249 = vmul.f32 %v214, 2.0
    %v1250 = vsub.f32 %v1218, %v1234
    %v1251 = vsub.f32 %v1219, %v1235
    %v1252 = vsub.f32 %v1220, %v1236
    %v1253 = vsub.f32 %v1221, %v1237
    %v1254 = vsub.f32 %v1222, %v1238
    %v1255 = vsub.f32 %v1223, %v1239
    %v1256 = vsub.f32 %v1224, %v1240
    %v1257 = vsub.f32 %v1225, %v1241
    %v1258 = vsub.f32 %v1226, %v1242
    %v1259 = vsub.f32 %v1227, %v1243
    %v1260 = vsub.f32 %v1228, %v1244
    %v1261 = vsub.f32 %v1229, %v1245
    %v1262 = vsub.f32 %v1230, %v1246
    %v1263 = vsub.f32 %v1231, %v1247
    %v1264 = vsub.f32 %v1232, %v1248
    %v1265 = vsub.f32 %v1233, %v1249
    %v1266 = vmax.f32 %v1250, 0.0
    %v1267 = vmax.f32 %v1251, 0.0
    %v1268 = vmax.f32 %v1252, 0.0
    %v1269 = vmax.f32 %v1253, 0.0
    %v1270 = vmax.f32 %v1254, 0.0
    %v1271 = vmax.f32 %v1255, 0.0
    %v1272 = vmax.f32 %v1256, 0.0
    %v1273 = vmax.f32 %v1257, 0.0
    %v1274 = vmax.f32 %v1258, 0.0
    %v1275 = vmax.f32 %v1259, 0.0
    %v1276 = vmax.f32 %v1260, 0.0
    %v1277 = vmax.f32 %v1261, 0.0
    %v1278 = vmax.f32 %v1262, 0.0
    %v1279 = vmax.f32 %v1263, 0.0
    %v1280 = vmax.f32 %v1264, 0.0
    %v1281 = vmax.f32 %v1265, 0.0
    %v1282 = vmul.f32 %v1266, -0.05
    %v1283 = vmul.f32 %v1267, -0.05
    %v1284 = vmul.f32 %v1268, -0.05
    %v1285 = vmul.f32 %v1269, -0.05
    %v1286 = vmul.f32 %v1270, -0.05
    %v1287 = vmul.f32 %v1271, -0.05
    %v1288 = vmul.f32 %v1272, -0.05
    %v1289 = vmul.f32 %v1273, -0.05
    %v1290 = vmul.f32 %v1274, -0.05
    %v1291 = vmul.f32 %v1275, -0.05
    %v1292 = vmul.f32 %v1276, -0.05
    %v1293 = vmul.f32 %v1277, -0.05
    %v1294 = vmul.f32 %v1278, -0.05
    %v1295 = vmul.f32 %v1279, -0.05
    %v1296 = vmul.f32 %v1280, -0.05
    %v1297 = vmul.f32 %v1281, -0.05
    %v1298 = vmul.f32 %v1282, 1.442695
    %v1299 = vpow.pop %v1298
    %v1300 = vmul.f32 %v1283, 1.442695
    %v1301 = vpow.pop %v1300
    %v1302 = vmul.f32 %v1284, 1.442695
    %v1303 = vpow.pop %v1302
    %v1304 = vmul.f32 %v1285, 1.442695
    %v1305 = vpow.pop %v1304
    %v1306 = vmul.f32 %v1286, 1.442695
    %v1307 = vpow.pop %v1306
    %v1308 = vmul.f32 %v1287, 1.442695
    %v1309 = vpow.pop %v1308
    %v1310 = vmul.f32 %v1288, 1.442695
    %v1311 = vpow.pop %v1310
    %v1312 = vmul.f32 %v1289, 1.442695
    %v1313 = vpow.pop %v1312
    %v1314 = vmul.f32 %v1290, 1.442695
    %v1315 = vpow.pop %v1314
    %v1316 = vmul.f32 %v1291, 1.442695
    %v1317 = vpow.pop %v1316
    %v1318 = vmul.f32 %v1292, 1.442695
    %v1319 = vpow.pop %v1318
    %v1320 = vmul.f32 %v1293, 1.442695
    %v1321 = vpow.pop %v1320
    %v1322 = vmul.f32 %v1294, 1.442695
    %v1323 = vpow.pop %v1322
    %v1324 = vmul.f32 %v1295, 1.442695
    %v1325 = vpow.pop %v1324
    %v1326 = vmul.f32 %v1296, 1.442695
    %v1327 = vpow.pop %v1326
    %v1328 = vmul.f32 %v1297, 1.442695
    %v1329 = vpow.pop %v1328
    %v1330 = vadd.f32 %v1299, 0.0
    %v1331 = vadd.f32 %v1301, 0.0
    %v1332 = vadd.f32 %v1303, 0.0
    %v1333 = vadd.f32 %v1305, 0.0
    %v1334 = vadd.f32 %v1307, 0.0
    %v1335 = vadd.f32 %v1309, 0.0
    %v1336 = vadd.f32 %v1311, 0.0
    %v1337 = vadd.f32 %v1313, 0.0
    %v1338 = vadd.f32 %v1315, 0.0
    %v1339 = vadd.f32 %v1317, 0.0
    %v1340 = vadd.f32 %v1319, 0.0
    %v1341 = vadd.f32 %v1321, 0.0
    %v1342 = vadd.f32 %v1323, 0.0
    %v1343 = vadd.f32 %v1325, 0.0
    %v1344 = vadd.f32 %v1327, 0.0
    %v1345 = vadd.f32 %v1329, 0.0
    %v1346 = vmul.f32 %v1266, -0.033333335
    %v1347 = vmul.f32 %v1267, -0.033333335
    %v1348 = vmul.f32 %v1268, -0.033333335
    %v1349 = vmul.f32 %v1269, -0.033333335
    %v1350 = vmul.f32 %v1270, -0.033333335
    %v1351 = vmul.f32 %v1271, -0.033333335
    %v1352 = vmul.f32 %v1272, -0.033333335
    %v1353 = vmul.f32 %v1273, -0.033333335
    %v1354 = vmul.f32 %v1274, -0.033333335
    %v1355 = vmul.f32 %v1275, -0.033333335
    %v1356 = vmul.f32 %v1276, -0.033333335
    %v1357 = vmul.f32 %v1277, -0.033333335
    %v1358 = vmul.f32 %v1278, -0.033333335
    %v1359 = vmul.f32 %v1279, -0.033333335
    %v1360 = vmul.f32 %v1280, -0.033333335
    %v1361 = vmul.f32 %v1281, -0.033333335
    %v1362 = vmul.f32 %v1346, 1.442695
    %v1363 = vpow.pop %v1362
    %v1364 = vmul.f32 %v1347, 1.442695
    %v1365 = vpow.pop %v1364
    %v1366 = vmul.f32 %v1348, 1.442695
    %v1367 = vpow.pop %v1366
    %v1368 = vmul.f32 %v1349, 1.442695
    %v1369 = vpow.pop %v1368
    %v1370 = vmul.f32 %v1350, 1.442695
    %v1371 = vpow.pop %v1370
    %v1372 = vmul.f32 %v1351, 1.442695
    %v1373 = vpow.pop %v1372
    %v1374 = vmul.f32 %v1352, 1.442695
    %v1375 = vpow.pop %v1374
    %v1376 = vmul.f32 %v1353, 1.442695
    %v1377 = vpow.pop %v1376
    %v1378 = vmul.f32 %v1354, 1.442695
    %v1379 = vpow.pop %v1378
    %v1380 = vmul.f32 %v1355, 1.442695
    %v1381 = vpow.pop %v1380
    %v1382 = vmul.f32 %v1356, 1.442695
    %v1383 = vpow.pop %v1382
    %v1384 = vmul.f32 %v1357, 1.442695
    %v1385 = vpow.pop %v1384
    %v1386 = vmul.f32 %v1358, 1.442695
    %v1387 = vpow.pop %v1386
    %v1388 = vmul.f32 %v1359, 1.442695
    %v1389 = vpow.pop %v1388
    %v1390 = vmul.f32 %v1360, 1.442695
    %v1391 = vpow.pop %v1390
    %v1392 = vmul.f32 %v1361, 1.442695
    %v1393 = vpow.pop %v1392
    %v1394 = vadd.f32 %v1330, %v1363
    %v1395 = vadd.f32 %v1331, %v1365
    %v1396 = vadd.f32 %v1332, %v1367
    %v1397 = vadd.f32 %v1333, %v1369
    %v1398 = vadd.f32 %v1334, %v1371
    %v1399 = vadd.f32 %v1335, %v1373
    %v1400 = vadd.f32 %v1336, %v1375
    %v1401 = vadd.f32 %v1337, %v1377
    %v1402 = vadd.f32 %v1338, %v1379
    %v1403 = vadd.f32 %v1339, %v1381
    %v1404 = vadd.f32 %v1340, %v1383
    %v1405 = vadd.f32 %v1341, %v1385
    %v1406 = vadd.f32 %v1342, %v1387
    %v1407 = vadd.f32 %v1343, %v1389
    %v1408 = vadd.f32 %v1344, %v1391
    %v1409 = vadd.f32 %v1345, %v1393
    %v1410 = vmul.f32 %v1266, -0.025
    %v1411 = vmul.f32 %v1267, -0.025
    %v1412 = vmul.f32 %v1268, -0.025
    %v1413 = vmul.f32 %v1269, -0.025
    %v1414 = vmul.f32 %v1270, -0.025
    %v1415 = vmul.f32 %v1271, -0.025
    %v1416 = vmul.f32 %v1272, -0.025
    %v1417 = vmul.f32 %v1273, -0.025
    %v1418 = vmul.f32 %v1274, -0.025
    %v1419 = vmul.f32 %v1275, -0.025
    %v1420 = vmul.f32 %v1276, -0.025
    %v1421 = vmul.f32 %v1277, -0.025
    %v1422 = vmul.f32 %v1278, -0.025
    %v1423 = vmul.f32 %v1279, -0.025
    %v1424 = vmul.f32 %v1280, -0.025
    %v1425 = vmul.f32 %v1281, -0.025
    %v1426 = vmul.f32 %v1410, 1.442695
    %v1427 = vpow.pop %v1426
    %v1428 = vmul.f32 %v1411, 1.442695
    %v1429 = vpow.pop %v1428
    %v1430 = vmul.f32 %v1412, 1.442695
    %v1431 = vpow.pop %v1430
    %v1432 = vmul.f32 %v1413, 1.442695
    %v1433 = vpow.pop %v1432
    %v1434 = vmul.f32 %v1414, 1.442695
    %v1435 = vpow.pop %v1434
    %v1436 = vmul.f32 %v1415, 1.442695
    %v1437 = vpow.pop %v1436
    %v1438 = vmul.f32 %v1416, 1.442695
    %v1439 = vpow.pop %v1438
    %v1440 = vmul.f32 %v1417, 1.442695
    %v1441 = vpow.pop %v1440
    %v1442 = vmul.f32 %v1418, 1.442695
    %v1443 = vpow.pop %v1442
    %v1444 = vmul.f32 %v1419, 1.442695
    %v1445 = vpow.pop %v1444
    %v1446 = vmul.f32 %v1420, 1.442695
    %v1447 = vpow.pop %v1446
    %v1448 = vmul.f32 %v1421, 1.442695
    %v1449 = vpow.pop %v1448
    %v1450 = vmul.f32 %v1422, 1.442695
    %v1451 = vpow.pop %v1450
    %v1452 = vmul.f32 %v1423, 1.442695
    %v1453 = vpow.pop %v1452
    %v1454 = vmul.f32 %v1424, 1.442695
    %v1455 = vpow.pop %v1454
    %v1456 = vmul.f32 %v1425, 1.442695
    %v1457 = vpow.pop %v1456
    %v1458 = vadd.f32 %v1394, %v1427
    %v1459 = vadd.f32 %v1395, %v1429
    %v1460 = vadd.f32 %v1396, %v1431
    %v1461 = vadd.f32 %v1397, %v1433
    %v1462 = vadd.f32 %v1398, %v1435
    %v1463 = vadd.f32 %v1399, %v1437
    %v1464 = vadd.f32 %v1400, %v1439
    %v1465 = vadd.f32 %v1401, %v1441
    %v1466 = vadd.f32 %v1402, %v1443
    %v1467 = vadd.f32 %v1403, %v1445
    %v1468 = vadd.f32 %v1404, %v1447
    %v1469 = vadd.f32 %v1405, %v1449
    %v1470 = vadd.f32 %v1406, %v1451
    %v1471 = vadd.f32 %v1407, %v1453
    %v1472 = vadd.f32 %v1408, %v1455
    %v1473 = vadd.f32 %v1409, %v1457
    %v1474 = vmul.f32 %v1266, -0.01
    %v1475 = vmul.f32 %v1267, -0.01
    %v1476 = vmul.f32 %v1268, -0.01
    %v1477 = vmul.f32 %v1269, -0.01
    %v1478 = vmul.f32 %v1270, -0.01
    %v1479 = vmul.f32 %v1271, -0.01
    %v1480 = vmul.f32 %v1272, -0.01
    %v1481 = vmul.f32 %v1273, -0.01
    %v1482 = vmul.f32 %v1274, -0.01
    %v1483 = vmul.f32 %v1275, -0.01
    %v1484 = vmul.f32 %v1276, -0.01
    %v1485 = vmul.f32 %v1277, -0.01
    %v1486 = vmul.f32 %v1278, -0.01
    %v1487 = vmul.f32 %v1279, -0.01
    %v1488 = vmul.f32 %v1280, -0.01
    %v1489 = vmul.f32 %v1281, -0.01
    %v1490 = vmul.f32 %v1474, 1.442695
    %v1491 = vpow.pop %v1490
    %v1492 = vmul.f32 %v1475, 1.442695
    %v1493 = vpow.pop %v1492
    %v1494 = vmul.f32 %v1476, 1.442695
    %v1495 = vpow.pop %v1494
    %v1496 = vmul.f32 %v1477, 1.442695
    %v1497 = vpow.pop %v1496
    %v1498 = vmul.f32 %v1478, 1.442695
    %v1499 = vpow.pop %v1498
    %v1500 = vmul.f32 %v1479, 1.442695
    %v1501 = vpow.pop %v1500
    %v1502 = vmul.f32 %v1480, 1.442695
    %v1503 = vpow.pop %v1502
    %v1504 = vmul.f32 %v1481, 1.442695
    %v1505 = vpow.pop %v1504
    %v1506 = vmul.f32 %v1482, 1.442695
    %v1507 = vpow.pop %v1506
    %v1508 = vmul.f32 %v1483, 1.442695
    %v1509 = vpow.pop %v1508
    %v1510 = vmul.f32 %v1484, 1.442695
    %v1511 = vpow.pop %v1510
    %v1512 = vmul.f32 %v1485, 1.442695
    %v1513 = vpow.pop %v1512
    %v1514 = vmul.f32 %v1486, 1.442695
    %v1515 = vpow.pop %v1514
    %v1516 = vmul.f32 %v1487, 1.442695
    %v1517 = vpow.pop %v1516
    %v1518 = vmul.f32 %v1488, 1.442695
    %v1519 = vpow.pop %v1518
    %v1520 = vmul.f32 %v1489, 1.442695
    %v1521 = vpow.pop %v1520
    %v1522 = vadd.f32 %v1458, %v1491
    %v1523 = vadd.f32 %v1459, %v1493
    %v1524 = vadd.f32 %v1460, %v1495
    %v1525 = vadd.f32 %v1461, %v1497
    %v1526 = vadd.f32 %v1462, %v1499
    %v1527 = vadd.f32 %v1463, %v1501
    %v1528 = vadd.f32 %v1464, %v1503
    %v1529 = vadd.f32 %v1465, %v1505
    %v1530 = vadd.f32 %v1466, %v1507
    %v1531 = vadd.f32 %v1467, %v1509
    %v1532 = vadd.f32 %v1468, %v1511
    %v1533 = vadd.f32 %v1469, %v1513
    %v1534 = vadd.f32 %v1470, %v1515
    %v1535 = vadd.f32 %v1471, %v1517
    %v1536 = vadd.f32 %v1472, %v1519
    %v1537 = vadd.f32 %v1473, %v1521
    %1538 = vadd.xlane.f32.xlu0 %v1522
    %v1539 = vpop.xlane.xlu0 %1538
    %1540 = vadd.xlane.f32.xlu0 %v1523
    %v1541 = vpop.xlane.xlu0 %1540
    %1542 = vadd.xlane.f32.xlu0 %v1524
    %v1543 = vpop.xlane.xlu0 %1542
    %1544 = vadd.xlane.f32.xlu0 %v1525
    %v1545 = vpop.xlane.xlu0 %1544
    %1546 = vadd.xlane.f32.xlu0 %v1526
    %v1547 = vpop.xlane.xlu0 %1546
    %1548 = vadd.xlane.f32.xlu0 %v1527
    %v1549 = vpop.xlane.xlu0 %1548
    %1550 = vadd.xlane.f32.xlu0 %v1528
    %v1551 = vpop.xlane.xlu0 %1550
    %1552 = vadd.xlane.f32.xlu0 %v1529
    %v1553 = vpop.xlane.xlu0 %1552
    %1554 = vadd.xlane.f32.xlu0 %v1530
    %v1555 = vpop.xlane.xlu0 %1554
    %1556 = vadd.xlane.f32.xlu0 %v1531
    %v1557 = vpop.xlane.xlu0 %1556
    %1558 = vadd.xlane.f32.xlu0 %v1532
    %v1559 = vpop.xlane.xlu0 %1558
    %1560 = vadd.xlane.f32.xlu0 %v1533
    %v1561 = vpop.xlane.xlu0 %1560
    %1562 = vadd.xlane.f32.xlu0 %v1534
    %v1563 = vpop.xlane.xlu0 %1562
    %1564 = vadd.xlane.f32.xlu0 %v1535
    %v1565 = vpop.xlane.xlu0 %1564
    %1566 = vadd.xlane.f32.xlu0 %v1536
    %v1567 = vpop.xlane.xlu0 %1566
    %1568 = vadd.xlane.f32.xlu0 %v1537
    %v1569 = vpop.xlane.xlu0 %1568
    %v1570 = vadd.f32 %v1539, %v1541
    %v1571 = vadd.f32 %v1570, %v1543
    %v1572 = vadd.f32 %v1571, %v1545
    %v1573 = vadd.f32 %v1572, %v1547
    %v1574 = vadd.f32 %v1573, %v1549
    %v1575 = vadd.f32 %v1574, %v1551
    %v1576 = vadd.f32 %v1575, %v1553
    %v1577 = vadd.f32 %v1576, %v1555
    %v1578 = vadd.f32 %v1577, %v1557
    %v1579 = vadd.f32 %v1578, %v1559
    %v1580 = vadd.f32 %v1579, %v1561
    %v1581 = vadd.f32 %v1580, %v1563
    %v1582 = vadd.f32 %v1581, %v1565
    %v1583 = vadd.f32 %v1582, %v1567
    %v1584 = vadd.f32 %v1583, %v1569
    %v1585 = vrot.slane %v1584, 4
    %v1586 = vadd.f32 %v1584, %v1585
    %v1587 = vrot.slane %v1586, 2
    %v1588 = vadd.f32 %v1586, %v1587
    %v1589 = vrot.slane %v1588, 1
    %v1590 = vadd.f32 %v1588, %v1589
    %v1591 = vmul.f32 %v1590, 2.0
    %v1592 = vsub.f32 %v1217, %v1591
    %vm1593 = vcmask 0
    %1594 = vst.msk [vmem:[#allocation5] sm:$0x1] %vm1593, %v1592
    // Predicated region
    $region10: #{tpu_custom_call.1} parent=1 // pred_check
      _
    $region11: #{tpu_custom_call.1} parent=1 // pred_check_branch
      %1596 = sbr.rel (0) target = $region13
    $region12: #{tpu_custom_call.1} parent=1 // pred_region
      %s1598 = ssub.s32 16, 16
      %1599 = vsyncadd [#allocation4], %s1598
      %s1601 = sshll.u32 [#allocation5], 4
      %s1602 = int_to_ptr.vmem [resolvable:$true] %s1601
      %1604 = dma.vmem_to_hbm [thread:$0]  %s1602, 16, %s1, [#allocation4]
    $region13: #{tpu_custom_call.1} parent=1 // pred_fallthru
      _
    // Predicated region
    $region14: #{tpu_custom_call.1} parent=1 // pred_check
      _
    $region15: #{tpu_custom_call.1} parent=1 // pred_check_branch
      %1606 = sbr.rel (0) target = $region17
    $region16: #{tpu_custom_call.1} parent=1 // pred_region
      %1607 = dma.done [#allocation4], 16
    $region17: #{tpu_custom_call.1} parent=1 // pred_fallthru
      _
    %1608 = vsyncpa [#allocation3], 1
    %1609 = vsyncpa [#allocation4], 1

</llo_original>
